<compile_context>
chip_gen: v5e
topology: v5e:2x2
jax: 0.10.0
libtpu: 0.0.40
codegen_flags: <defaults>
</compile_context>

<pallas_src>
import functools

import jax
import jax.numpy as jnp
from jax.experimental import pallas as pl
from jax.experimental.pallas import tpu as pltpu

_MIB = 1 << 20
_XW_RESIDENT_BYTES = 8 * _MIB       # keep resident XW (double-buffered) modest
_FUSED_VMEM_BUDGET = 20 * _MIB      # whole-problem-in-VMEM threshold


def _round_up(v, m):
    return ((v + m - 1) // m) * m


def _vmem_limit(nbytes):
    """Scoped-VMEM request with headroom; valid on v5e/v6e/v7x."""
    return int(min(max(nbytes + 8 * _MIB, 32 * _MIB), 48 * _MIB))


# ----------------------------------------------------------------------------
# Kernels
# ----------------------------------------------------------------------------
def _fused_kernel(a_ref, x_ref, w1_ref, b1_ref, w2_ref, b2_ref, o_ref):
    """Whole two-layer forward with everything VMEM resident (small graphs)."""
    bf = jnp.bfloat16
    xw1 = jnp.dot(x_ref[...], w1_ref[...],
                  preferred_element_type=jnp.float32).astype(bf)
    h1 = jnp.dot(a_ref[...], xw1, preferred_element_type=jnp.float32) + b1_ref[...]
    h1 = jnp.maximum(h1, 0.0).astype(bf)
    # TODO(synk): dropout is identity (eval mode); training-mode mask not wired in.
    xw2 = jnp.dot(h1, w2_ref[...], preferred_element_type=jnp.float32).astype(bf)
    o_ref[...] = (
        jnp.dot(a_ref[...], xw2, preferred_element_type=jnp.float32) + b2_ref[...]
    ).astype(o_ref.dtype)


def _project_kernel(x_ref, w_ref, o_ref):
    """o = x @ w for one row tile.  x:(tm,Fp) bf16, w:(Fp,Hp) bf16 -> o bf16."""
    o_ref[...] = jnp.dot(
        x_ref[...], w_ref[...], preferred_element_type=jnp.float32
    ).astype(o_ref.dtype)


def _agg_resident_kernel(a_ref, xw_ref, b_ref, o_ref, acc_ref, *, tk, apply_relu):
    """out = A @ XW + b [+relu]; XW fully VMEM-resident, A streamed in tiles."""
    k = pl.program_id(1)

    @pl.when(k == 0)
    def _():
        acc_ref[...] = jnp.zeros_like(acc_ref)

    r0 = pl.multiple_of(k * tk, tk)
    acc_ref[...] += jnp.dot(
        a_ref[...], xw_ref[pl.ds(r0, tk), :], preferred_element_type=jnp.float32
    )

    @pl.when(k == pl.num_programs(1) - 1)
    def _():
        h = acc_ref[...] + b_ref[...]
        if apply_relu:
            h = jnp.maximum(h, 0.0)
        o_ref[...] = h.astype(o_ref.dtype)


def _agg_stream_kernel(a_ref, xw_ref, b_ref, o_ref, acc_ref, *, apply_relu):
    """Fallback: XW k-slab streamed alongside the A tiles (huge graphs)."""
    k = pl.program_id(1)

    @pl.when(k == 0)
    def _():
        acc_ref[...] = jnp.zeros_like(acc_ref)

    acc_ref[...] += jnp.dot(
        a_ref[...], xw_ref[...], preferred_element_type=jnp.float32
    )

    @pl.when(k == pl.num_programs(1) - 1)
    def _():
        h = acc_ref[...] + b_ref[...]
        if apply_relu:
            h = jnp.maximum(h, 0.0)
        o_ref[...] = h.astype(o_ref.dtype)


# ----------------------------------------------------------------------------
# pallas_call wrappers
# ----------------------------------------------------------------------------
def _fused(a_p, x_p, w1_p, b1_p, w2_p, b2_p, *, vmem_bytes):
    n_p = a_p.shape[0]
    h_p = w1_p.shape[1]
    vmem_specs = [pl.BlockSpec(memory_space=pltpu.MemorySpace.VMEM)
                  for _ in range(6)]
    return pl.pallas_call(
        _fused_kernel,
        out_shape=jax.ShapeDtypeStruct((n_p, h_p), jnp.float32),
        in_specs=vmem_specs,
        out_specs=pl.BlockSpec(memory_space=pltpu.MemorySpace.VMEM),
        compiler_params=pltpu.CompilerParams(
            vmem_limit_bytes=_vmem_limit(vmem_bytes)),
    )(a_p, x_p, w1_p, b1_p, w2_p, b2_p)


def _project(x_bf16, w_bf16, *, tm):
    """XW = X @ W, tiled over rows.  Returns bf16 [N, Hp]."""
    n, f = x_bf16.shape
    h = w_bf16.shape[1]
    vmem_bytes = 2 * (tm * f + f * h + tm * h) * 2
    return pl.pallas_call(
        _project_kernel,
        out_shape=jax.ShapeDtypeStruct((n, h), jnp.bfloat16),
        grid=(n // tm,),
        in_specs=[
            pl.BlockSpec((tm, f), lambda i: (i, 0)),
            pl.BlockSpec((f, h), lambda i: (0, 0)),   # constant index -> resident
        ],
        out_specs=pl.BlockSpec((tm, h), lambda i: (i, 0)),
        compiler_params=pltpu.CompilerParams(
            dimension_semantics=("parallel",),
            vmem_limit_bytes=_vmem_limit(vmem_bytes)),
        cost_estimate=pl.CostEstimate(
            flops=2 * n * f * h,
            transcendentals=0,
            bytes_accessed=2 * (n * f + f * h + n * h)),
    )(x_bf16, w_bf16)


def _aggregate(a_bf16, xw_bf16, bias_f32, *, apply_relu, out_dtype, tm, tk):
    """out = A @ XW + b [+ relu], tiled (rows parallel, k reduction)."""
    n = a_bf16.shape[0]
    h = xw_bf16.shape[1]
    out_isz = jnp.dtype(out_dtype).itemsize
    xw_bytes = n * h * 2
    resident = xw_bytes <= _XW_RESIDENT_BYTES

    if resident:
        kernel = functools.partial(_agg_resident_kernel, tk=tk,
                                   apply_relu=apply_relu)
        # Constant block index -> XW DMA'd once and kept VMEM resident.
        xw_spec = pl.BlockSpec((n, h), lambda i, k: (0, 0))
        vmem_bytes = (2 * xw_bytes + 2 * (tm * tk * 2)
                      + 2 * (tm * h * out_isz) + tm * h * 4)
        xw_traffic = xw_bytes
    else:
        kernel = functools.partial(_agg_stream_kernel, apply_relu=apply_relu)
        xw_spec = pl.BlockSpec((tk, h), lambda i, k: (k, 0))
        vmem_bytes = (2 * (tm * tk * 2) + 2 * (tk * h * 2)
                      + 2 * (tm * h * out_isz) + tm * h * 4)
        xw_traffic = (n // tm) * xw_bytes

    return pl.pallas_call(
        kernel,
        out_shape=jax.ShapeDtypeStruct((n, h), out_dtype),
        grid=(n // tm, n // tk),
        in_specs=[
            pl.BlockSpec((tm, tk), lambda i, k: (i, k)),   # A tile (streamed)
            xw_spec,
            pl.BlockSpec((1, h), lambda i, k: (0, 0)),     # bias (resident)
        ],
        out_specs=pl.BlockSpec((tm, h), lambda i, k: (i, 0)),
        scratch_shapes=[pltpu.VMEM((tm, h), jnp.float32)],
        compiler_params=pltpu.CompilerParams(
            dimension_semantics=("parallel", "arbitrary"),
            vmem_limit_bytes=_vmem_limit(vmem_bytes)),
        cost_estimate=pl.CostEstimate(
            flops=2 * n * n * h,
            transcendentals=0,
            bytes_accessed=2 * n * n + xw_traffic + out_isz * n * h),
    )(a_bf16, xw_bf16, bias_f32)


# ----------------------------------------------------------------------------
# Host-side preparation + forward
# ----------------------------------------------------------------------------
def normalized_adjacency(adj):
    """D_dst^{-1/2} A D_src^{-1/2}, degrees clamped to >= 1 (norm='both')."""
    deg_out = jnp.maximum(adj.sum(axis=0), 1.0)   # source (out) degrees
    deg_in = jnp.maximum(adj.sum(axis=1), 1.0)    # destination (in) degrees
    return (deg_in ** -0.5)[:, None] * adj * (deg_out ** -0.5)[None, :]


def prepare_adjacency(adj, *, pad_to=512):
    """Normalize + pad + bf16-cast the adjacency ONCE per graph.

    Hoisted out of the per-forward jitted path: A is static across calls, so
    repeating this pad/cast every step would add ~1.5x the A traffic of a
    whole aggregation layer.
    """
    n = adj.shape[0]
    n_p = _round_up(n, pad_to)
    a_hat = normalized_adjacency(adj.astype(jnp.float32))
    return jnp.zeros((n_p, n_p), jnp.bfloat16).at[:n, :n].set(
        a_hat.astype(jnp.bfloat16))


def gcn_body(a_p, x, w1, b1, w2, b2, *, tm=512, tk=512,
             fused_vmem_budget=_FUSED_VMEM_BUDGET):
    """Two-layer GCN body forward (eval mode: dropout = identity).

    a_p: normalized adjacency already padded (multiple of 512) and cast to
         bf16 by prepare_adjacency().
    """
    n, f = x.shape
    h = w1.shape[1]
    n_p = a_p.shape[0]
    assert n_p >= n and n_p % 128 == 0, "use prepare_adjacency() to pad A"

    f_p = _round_up(f, 128)
    h_p = _round_up(h, 128)

    bf = jnp.bfloat16
    # Zero-padding keeps the math exact: padded rows/cols contribute zero.
    x_p = jnp.zeros((n_p, f_p), bf).at[:n, :f].set(x.astype(bf))
    w1_p = jnp.zeros((f_p, h_p), bf).at[:f, :h].set(w1.astype(bf))
    w2_p = jnp.zeros((h_p, h_p), bf).at[:h, :h].set(w2.astype(bf))
    b1_p = jnp.zeros((1, h_p), jnp.float32).at[:, :h].set(
        b1.astype(jnp.float32).reshape(1, -1))
    b2_p = jnp.zeros((1, h_p), jnp.float32).at[:, :h].set(
        b2.astype(jnp.float32).reshape(1, -1))

    # Whole-problem VMEM footprint (A, X, weights, out + slack for temps).
    fused_bytes = (2 * n_p * n_p + 2 * n_p * f_p + 2 * f_p * h_p
                   + 2 * h_p * h_p + 4 * n_p * h_p + 8 * n_p * h_p)

    if fused_bytes <= fused_vmem_budget:
        # Single launch, no HBM round trips for xw1 / h1 / xw2.
        out = _fused(a_p, x_p, w1_p, b1_p, w2_p, b2_p, vmem_bytes=fused_bytes)
        return out[:n, :h]

    # ---- tiled path for large graphs ------------------------------------
    assert n_p % tm == 0 and n_p % tk == 0, (
        "prepare_adjacency pad_to must be a multiple of the aggregation tiles")
    tm_proj = 1024 if n_p % 1024 == 0 else tm

    # ---- layer 1: relu( A (X W1) + b1 ) ---------------------------------
    xw1 = _project(x_p, w1_p, tm=tm_proj)
    h1 = _aggregate(a_p, xw1, b1_p, apply_relu=True,
                    out_dtype=bf, tm=tm, tk=tk)

    # ---- dropout: identity in eval/inference mode -----------------------

    # ---- layer 2: A (h1 W2) + b2 ----------------------------------------
    xw2 = _project(h1, w2_p, tm=tm_proj)
    out = _aggregate(a_p, xw2, b2_p, apply_relu=False,
                     out_dtype=jnp.float32, tm=tm, tk=tk)
    return out[:n, :h]


# ----------------------------------------------------------------------------
# Reference
# ----------------------------------------------------------------------------
def reference_jax(a_hat, x, w1, b1, w2, b2):
    """f32 reference mimicking the kernel's bf16 input/intermediate rounding."""
    bf = jnp.bfloat16

    def q(v):  # bf16 quantize, compute in f32
        return v.astype(bf).astype(jnp.float32)

    a32, x32, w1_32, w2_32 = q(a_hat), q(x), q(w1), q(w2)
    xw1 = q(x32 @ w1_32)
    h1 = q(jnp.maximum(a32 @ xw1 + b1, 0.0))
    xw2 = q(h1 @ w2_32)
    return a32 @ xw2 + b2


# ----------------------------------------------------------------------------
# Demo / self-test
# ----------------------------------------------------------------------------
def _make_case(key, n, nfeat, nhid, density):
    k_adj, k_x, k_w1, k_w2, k_b1, k_b2 = jax.random.split(key, 6)
    upper = (jax.random.uniform(k_adj, (n, n)) < density).astype(jnp.float32)
    adj = jnp.triu(upper, k=1)
    adj = adj + adj.T
    x = jax.random.normal(k_x, (n, nfeat), dtype=jnp.float32)
    w1 = jax.random.normal(k_w1, (nfeat, nhid), jnp.float32) * (1.0 / nfeat) ** 0.5
    b1 = 0.1 * jax.random.normal(k_b1, (1, nhid), jnp.float32)
    w2 = jax.random.normal(k_w2, (nhid, nhid), jnp.float32) * (1.0 / nhid) ** 0.5
    b2 = 0.1 * jax.random.normal(k_b2, (1, nhid), jnp.float32)
    return adj, x, w1, b1, w2, b2


if __name__ == "__main__":
    key = jax.random.PRNGKey(0)
    k1, k2 = jax.random.split(key)

    # --- case 1: small graph -> single fused VMEM-resident kernel ---------
    adj, x, w1, b1, w2, b2 = _make_case(k1, n=200, nfeat=16, nhid=32, density=0.1)
    a_p = prepare_adjacency(adj)              # hoisted: once per graph
    step = jax.jit(gcn_body)
    out = jax.block_until_ready(step(a_p, x, w1, b1, w2, b2))
    ref = reference_jax(normalized_adjacency(adj), x, w1, b1, w2, b2)
    assert out.shape == (200, 32)
    assert jnp.allclose(out, ref, atol=1e-2, rtol=1e-2), float(
        jnp.max(jnp.abs(out - ref)))

    # --- case 2: force the tiled path (512 tiles, VMEM-resident XW) -------
    adj, x, w1, b1, w2, b2 = _make_case(k2, n=1200, nfeat=32, nhid=64, density=0.05)
    a_p = prepare_adjacency(adj)
    step_tiled = jax.jit(functools.partial(gcn_body, fused_vmem_budget=0))
    out = jax.block_until_ready(step_tiled(a_p, x, w1, b1, w2, b2))
    ref = reference_jax(normalized_adjacency(adj), x, w1, b1, w2, b2)
    assert out.shape == (1200, 64)
    assert jnp.allclose(out, ref, atol=1e-2, rtol=1e-2), float(
        jnp.max(jnp.abs(out - ref)))

    print("KERNEL_OK")
</pallas_src>

<mosaic_0001>
module attributes {stable_mosaic.version = 11 : i64} {
  func.func @_fused_kernel(%arg0: memref<512x512xbf16, #tpu.memory_space<vmem>>, %arg1: memref<512x128xbf16, #tpu.memory_space<vmem>>, %arg2: memref<128x128xbf16, #tpu.memory_space<vmem>>, %arg3: memref<1x128xf32, #tpu.memory_space<vmem>>, %arg4: memref<128x128xbf16, #tpu.memory_space<vmem>>, %arg5: memref<1x128xf32, #tpu.memory_space<vmem>>, %arg6: memref<512x128xf32, #tpu.memory_space<vmem>>) attributes {dimension_semantics = [], scalar_prefetch = 0 : i64, scratch_operands = 0 : i64, tpu.core_type = #tpu.core_type<tc>} {
    %c0 = arith.constant 0 : index
    %c0_0 = arith.constant 0 : index
    %0 = vector.load %arg1[%c0, %c0_0] : memref<512x128xbf16, #tpu.memory_space<vmem>>, vector<512x128xbf16>
    %c0_1 = arith.constant 0 : index
    %c0_2 = arith.constant 0 : index
    %1 = vector.load %arg2[%c0_1, %c0_2] : memref<128x128xbf16, #tpu.memory_space<vmem>>, vector<128x128xbf16>
    %cst = arith.constant dense<0.000000e+00> : vector<512x128xf32>
    %2 = tpu.matmul %0, %1, %cst {dimension_numbers = #tpu.dot_dimension_numbers<[1], [0], [0], [1], [0, 0, 1, 1], [], []>} : vector<512x128xbf16>, vector<128x128xbf16>, vector<512x128xf32> -> vector<512x128xf32>
    %3 = arith.truncf %2 : vector<512x128xf32> to vector<512x128xbf16>
    %c0_3 = arith.constant 0 : index
    %c0_4 = arith.constant 0 : index
    %4 = vector.load %arg0[%c0_3, %c0_4] : memref<512x512xbf16, #tpu.memory_space<vmem>>, vector<512x512xbf16>
    %cst_5 = arith.constant dense<0.000000e+00> : vector<512x128xf32>
    %5 = tpu.matmul %4, %3, %cst_5 {dimension_numbers = #tpu.dot_dimension_numbers<[1], [0], [0], [1], [0, 0, 1, 1], [], []>} : vector<512x512xbf16>, vector<512x128xbf16>, vector<512x128xf32> -> vector<512x128xf32>
    %c0_6 = arith.constant 0 : index
    %c0_7 = arith.constant 0 : index
    %6 = vector.load %arg3[%c0_6, %c0_7] : memref<1x128xf32, #tpu.memory_space<vmem>>, vector<1x128xf32>
    %7 = vector.broadcast %6 : vector<1x128xf32> to vector<512x128xf32>
    %8 = arith.addf %5, %7 : vector<512x128xf32>
    %cst_8 = arith.constant 0.000000e+00 : f32
    %9 = vector.broadcast %cst_8 : f32 to vector<512x128xf32>
    %10 = arith.maximumf %8, %9 : vector<512x128xf32>
    %11 = arith.truncf %10 : vector<512x128xf32> to vector<512x128xbf16>
    %c0_9 = arith.constant 0 : index
    %c0_10 = arith.constant 0 : index
    %12 = vector.load %arg4[%c0_9, %c0_10] : memref<128x128xbf16, #tpu.memory_space<vmem>>, vector<128x128xbf16>
    %cst_11 = arith.constant dense<0.000000e+00> : vector<512x128xf32>
    %13 = tpu.matmul %11, %12, %cst_11 {dimension_numbers = #tpu.dot_dimension_numbers<[1], [0], [0], [1], [0, 0, 1, 1], [], []>} : vector<512x128xbf16>, vector<128x128xbf16>, vector<512x128xf32> -> vector<512x128xf32>
    %14 = arith.truncf %13 : vector<512x128xf32> to vector<512x128xbf16>
    %c0_12 = arith.constant 0 : index
    %c0_13 = arith.constant 0 : index
    %15 = vector.load %arg0[%c0_12, %c0_13] : memref<512x512xbf16, #tpu.memory_space<vmem>>, vector<512x512xbf16>
    %cst_14 = arith.constant dense<0.000000e+00> : vector<512x128xf32>
    %16 = tpu.matmul %15, %14, %cst_14 {dimension_numbers = #tpu.dot_dimension_numbers<[1], [0], [0], [1], [0, 0, 1, 1], [], []>} : vector<512x512xbf16>, vector<512x128xbf16>, vector<512x128xf32> -> vector<512x128xf32>
    %c0_15 = arith.constant 0 : index
    %c0_16 = arith.constant 0 : index
    %17 = vector.load %arg5[%c0_15, %c0_16] : memref<1x128xf32, #tpu.memory_space<vmem>>, vector<1x128xf32>
    %18 = vector.broadcast %17 : vector<1x128xf32> to vector<512x128xf32>
    %19 = arith.addf %16, %18 : vector<512x128xf32>
    %c0_17 = arith.constant 0 : index
    %c0_18 = arith.constant 0 : index
    %20 = vector.load %arg6[%c0_17, %c0_18] : memref<512x128xf32, #tpu.memory_space<vmem>>, vector<512x128xf32>
    tpu.vector_store %arg6[%c0_17, %c0_18], %19 {strides = array<i32>} : memref<512x128xf32, #tpu.memory_space<vmem>>, vector<512x128xf32>,
    return
  }
}

</mosaic_0001>

<llo_original>
// kernel: gcn_body.1
$region0: #{gcn_body.1}
  #allocation0 [shape = 'u32[]', space=smem, size = 0x4, offset = 0x4, fixed_abs, tag = 'smem constant byte address 0x4 - core index']
  #allocation1 [shape = 'u32[72,128]{1,0:T(1,128)}', space=vmem, size = 0x9000, scoped, tag = 'internal scratch']
  %s0 = inlined_call_operand.hbm [shape: bf16[512,512], index: 0, kind: input, shape index: {}]
  %s1 = inlined_call_operand.vmem [shape: bf16[512,128], index: 1, kind: input, shape index: {}]
  %s2 = inlined_call_operand.vmem [shape: bf16[128,128], index: 2, kind: input, shape index: {}]
  %s3 = inlined_call_operand.vmem [shape: f32[1,128], index: 3, kind: input, shape index: {}]
  %s4 = inlined_call_operand.vmem [shape: bf16[128,128], index: 4, kind: input, shape index: {}]
  %s5 = inlined_call_operand.vmem [shape: f32[1,128], index: 5, kind: input, shape index: {}]
  %s6 = inlined_call_operand.vmem [shape: f32[512,128], index: 6, kind: output, shape index: {}]
  %s7 = sld [smem:[#allocation0]]
  $region38: #{gcn_body.1} parent=0
    _
  %s9 = ssub.s32 1, %s7
  %s10 = scalar_select 0, %s9, %s7
  $region1: #{gcn_body.1} parent=0
    #allocation2 [shape = 'u8[524288]{0}', space=vmem, size = 0x80000, scoped, tag = 'input window, operand 0, single buffered']
    #allocation3 [shape = 's32[1]{0}', space=sflag, size = 0x4, scoped, tag = 'scoped memory for gcn_body.1']
    %11 = vsyncpa [#allocation3], 0
    // Predicated region
    $region2: #{gcn_body.1} parent=1 // pred_check
      _
    $region3: #{gcn_body.1} parent=1 // pred_check_branch
      %13 = sbr.rel (0) target = $region5
    $region4: #{gcn_body.1} parent=1 // pred_region
      %15 = vsyncadd [#allocation3], 0
      %s16 = sshll.u32 %s0, 4
      %s17 = int_to_ptr.hbm [resolvable:$true] %s16
      %s18 = sshll.u32 [#allocation2], 4
      %s19 = int_to_ptr.vmem [resolvable:$true] %s18
      %24 = dma.hbm_to_vmem [thread:$0]  %s17, 16384, %s19, [#allocation3], 256, 256, 16
    $region5: #{gcn_body.1} parent=1 // pred_fallthru
      _
    // Predicated region
    $region6: #{gcn_body.1} parent=1 // pred_check
      _
    $region7: #{gcn_body.1} parent=1 // pred_check_branch
      %26 = sbr.rel (0) target = $region9
    $region8: #{gcn_body.1} parent=1 // pred_region
      _
    $region9: #{gcn_body.1} parent=1 // pred_fallthru
      _
    // Predicated region
    $region10: #{gcn_body.1} parent=1 // pred_check
      _
    $region11: #{gcn_body.1} parent=1 // pred_check_branch
      %28 = sbr.rel (0) target = $region13
    $region12: #{gcn_body.1} parent=1 // pred_region
      _
    $region13: #{gcn_body.1} parent=1 // pred_fallthru
      _
    // Predicated region
    $region14: #{gcn_body.1} parent=1 // pred_check
      _
    $region15: #{gcn_body.1} parent=1 // pred_check_branch
      %30 = sbr.rel (0) target = $region17
    $region16: #{gcn_body.1} parent=1 // pred_region
      _
    $region17: #{gcn_body.1} parent=1 // pred_fallthru
      _
    // Predicated region
    $region18: #{gcn_body.1} parent=1 // pred_check
      _
    $region19: #{gcn_body.1} parent=1 // pred_check_branch
      %32 = sbr.rel (0) target = $region21
    $region20: #{gcn_body.1} parent=1 // pred_region
      _
    $region21: #{gcn_body.1} parent=1 // pred_fallthru
      _
    // Predicated region
    $region22: #{gcn_body.1} parent=1 // pred_check
      _
    $region23: #{gcn_body.1} parent=1 // pred_check_branch
      %34 = sbr.rel (0) target = $region25
    $region24: #{gcn_body.1} parent=1 // pred_region
      _
    $region25: #{gcn_body.1} parent=1 // pred_fallthru
      _
    // Predicated region
    $region26: #{gcn_body.1} parent=1 // pred_check
      _
    $region27: #{gcn_body.1} parent=1 // pred_check_branch
      %36 = sbr.rel (0) target = $region29
    $region28: #{gcn_body.1} parent=1 // pred_region
      %38 = dma.done [#allocation3], 16384
    $region29: #{gcn_body.1} parent=1 // pred_fallthru
      _
    %v39 = vld [vmem:[%s1] sm:$0xf]
    %v40 = vld [vmem:[%s1 + $0x4] sm:$0xf]
    %v41 = vld [vmem:[%s1 + $0x8] sm:$0xf]
    %v42 = vld [vmem:[%s1 + $0xc] sm:$0xf]
    %v43 = vld [vmem:[%s1 + $0x10] sm:$0xf]
    %v44 = vld [vmem:[%s1 + $0x14] sm:$0xf]
    %v45 = vld [vmem:[%s1 + $0x18] sm:$0xf]
    %v46 = vld [vmem:[%s1 + $0x1c] sm:$0xf]
    %v47 = vld [vmem:[%s1 + $0x20] sm:$0xf]
    %v48 = vld [vmem:[%s1 + $0x24] sm:$0xf]
    %v49 = vld [vmem:[%s1 + $0x28] sm:$0xf]
    %v50 = vld [vmem:[%s1 + $0x2c] sm:$0xf]
    %v51 = vld [vmem:[%s1 + $0x30] sm:$0xf]
    %v52 = vld [vmem:[%s1 + $0x34] sm:$0xf]
    %v53 = vld [vmem:[%s1 + $0x38] sm:$0xf]
    %v54 = vld [vmem:[%s1 + $0x3c] sm:$0xf]
    %v55 = vld [vmem:[%s1 + $0x40] sm:$0xf]
    %v56 = vld [vmem:[%s1 + $0x44] sm:$0xf]
    %v57 = vld [vmem:[%s1 + $0x48] sm:$0xf]
    %v58 = vld [vmem:[%s1 + $0x4c] sm:$0xf]
    %v59 = vld [vmem:[%s1 + $0x50] sm:$0xf]
    %v60 = vld [vmem:[%s1 + $0x54] sm:$0xf]
    %v61 = vld [vmem:[%s1 + $0x58] sm:$0xf]
    %v62 = vld [vmem:[%s1 + $0x5c] sm:$0xf]
    %v63 = vld [vmem:[%s1 + $0x60] sm:$0xf]
    %v64 = vld [vmem:[%s1 + $0x64] sm:$0xf]
    %v65 = vld [vmem:[%s1 + $0x68] sm:$0xf]
    %v66 = vld [vmem:[%s1 + $0x6c] sm:$0xf]
    %v67 = vld [vmem:[%s1 + $0x70] sm:$0xf]
    %v68 = vld [vmem:[%s1 + $0x74] sm:$0xf]
    %v69 = vld [vmem:[%s1 + $0x78] sm:$0xf]
    %v70 = vld [vmem:[%s1 + $0x7c] sm:$0xf]
    %v71 = vld [vmem:[%s1 + $0x80] sm:$0xf]
    %v72 = vld [vmem:[%s1 + $0x84] sm:$0xf]
    %v73 = vld [vmem:[%s1 + $0x88] sm:$0xf]
    %v74 = vld [vmem:[%s1 + $0x8c] sm:$0xf]
    %v75 = vld [vmem:[%s1 + $0x90] sm:$0xf]
    %v76 = vld [vmem:[%s1 + $0x94] sm:$0xf]
    %v77 = vld [vmem:[%s1 + $0x98] sm:$0xf]
    %v78 = vld [vmem:[%s1 + $0x9c] sm:$0xf]
    %v79 = vld [vmem:[%s1 + $0xa0] sm:$0xf]
    %v80 = vld [vmem:[%s1 + $0xa4] sm:$0xf]
    %v81 = vld [vmem:[%s1 + $0xa8] sm:$0xf]
    %v82 = vld [vmem:[%s1 + $0xac] sm:$0xf]
    %v83 = vld [vmem:[%s1 + $0xb0] sm:$0xf]
    %v84 = vld [vmem:[%s1 + $0xb4] sm:$0xf]
    %v85 = vld [vmem:[%s1 + $0xb8] sm:$0xf]
    %v86 = vld [vmem:[%s1 + $0xbc] sm:$0xf]
    %v87 = vld [vmem:[%s1 + $0xc0] sm:$0xf]
    %v88 = vld [vmem:[%s1 + $0xc4] sm:$0xf]
    %v89 = vld [vmem:[%s1 + $0xc8] sm:$0xf]
    %v90 = vld [vmem:[%s1 + $0xcc] sm:$0xf]
    %v91 = vld [vmem:[%s1 + $0xd0] sm:$0xf]
    %v92 = vld [vmem:[%s1 + $0xd4] sm:$0xf]
    %v93 = vld [vmem:[%s1 + $0xd8] sm:$0xf]
    %v94 = vld [vmem:[%s1 + $0xdc] sm:$0xf]
    %v95 = vld [vmem:[%s1 + $0xe0] sm:$0xf]
    %v96 = vld [vmem:[%s1 + $0xe4] sm:$0xf]
    %v97 = vld [vmem:[%s1 + $0xe8] sm:$0xf]
    %v98 = vld [vmem:[%s1 + $0xec] sm:$0xf]
    %v99 = vld [vmem:[%s1 + $0xf0] sm:$0xf]
    %v100 = vld [vmem:[%s1 + $0xf4] sm:$0xf]
    %v101 = vld [vmem:[%s1 + $0xf8] sm:$0xf]
    %v102 = vld [vmem:[%s1 + $0xfc] sm:$0xf]
    %v103 = vld [vmem:[%s2] sm:$0xf]
    %v104 = vld [vmem:[%s2 + $0x4] sm:$0xf]
    %v105 = vld [vmem:[%s2 + $0x8] sm:$0xf]
    %v106 = vld [vmem:[%s2 + $0xc] sm:$0xf]
    %v107 = vld [vmem:[%s2 + $0x10] sm:$0xf]
    %v108 = vld [vmem:[%s2 + $0x14] sm:$0xf]
    %v109 = vld [vmem:[%s2 + $0x18] sm:$0xf]
    %v110 = vld [vmem:[%s2 + $0x1c] sm:$0xf]
    %v111 = vld [vmem:[%s2 + $0x20] sm:$0xf]
    %v112 = vld [vmem:[%s2 + $0x24] sm:$0xf]
    %v113 = vld [vmem:[%s2 + $0x28] sm:$0xf]
    %v114 = vld [vmem:[%s2 + $0x2c] sm:$0xf]
    %v115 = vld [vmem:[%s2 + $0x30] sm:$0xf]
    %v116 = vld [vmem:[%s2 + $0x34] sm:$0xf]
    %v117 = vld [vmem:[%s2 + $0x38] sm:$0xf]
    %v118 = vld [vmem:[%s2 + $0x3c] sm:$0xf]
    %v183 = vunpack.c.l.b16 %v39
    %v184 = vunpack.c.l.b16 %v40
    %v185 = vunpack.c.l.b16 %v41
    %v186 = vunpack.c.l.b16 %v42
    %v187 = vunpack.c.l.b16 %v43
    %v188 = vunpack.c.l.b16 %v44
    %v189 = vunpack.c.l.b16 %v45
    %v190 = vunpack.c.l.b16 %v46
    %v191 = vunpack.c.l.b16 %v47
    %v192 = vunpack.c.l.b16 %v48
    %v193 = vunpack.c.l.b16 %v49
    %v194 = vunpack.c.l.b16 %v50
    %v195 = vunpack.c.l.b16 %v51
    %v196 = vunpack.c.l.b16 %v52
    %v197 = vunpack.c.l.b16 %v53
    %v198 = vunpack.c.l.b16 %v54
    %v199 = vunpack.c.l.b16 %v55
    %v200 = vunpack.c.l.b16 %v56
    %v201 = vunpack.c.l.b16 %v57
    %v202 = vunpack.c.l.b16 %v58
    %v203 = vunpack.c.l.b16 %v59
    %v204 = vunpack.c.l.b16 %v60
    %v205 = vunpack.c.l.b16 %v61
    %v206 = vunpack.c.l.b16 %v62
    %v207 = vunpack.c.l.b16 %v63
    %v208 = vunpack.c.l.b16 %v64
    %v209 = vunpack.c.l.b16 %v65
    %v210 = vunpack.c.l.b16 %v66
    %v211 = vunpack.c.l.b16 %v67
    %v212 = vunpack.c.l.b16 %v68
    %v213 = vunpack.c.l.b16 %v69
    %v214 = vunpack.c.l.b16 %v70
    %v215 = vunpack.c.l.b16 %v71
    %v216 = vunpack.c.l.b16 %v72
    %v217 = vunpack.c.l.b16 %v73
    %v218 = vunpack.c.l.b16 %v74
    %v219 = vunpack.c.l.b16 %v75
    %v220 = vunpack.c.l.b16 %v76
    %v221 = vunpack.c.l.b16 %v77
    %v222 = vunpack.c.l.b16 %v78
    %v223 = vunpack.c.l.b16 %v79
    %v224 = vunpack.c.l.b16 %v80
    %v225 = vunpack.c.l.b16 %v81
    %v226 = vunpack.c.l.b16 %v82
    %v227 = vunpack.c.l.b16 %v83
    %v228 = vunpack.c.l.b16 %v84
    %v229 = vunpack.c.l.b16 %v85
    %v230 = vunpack.c.l.b16 %v86
    %v231 = vunpack.c.l.b16 %v87
    %v232 = vunpack.c.l.b16 %v88
    %v233 = vunpack.c.l.b16 %v89
    %v234 = vunpack.c.l.b16 %v90
    %v235 = vunpack.c.l.b16 %v91
    %v236 = vunpack.c.l.b16 %v92
    %v237 = vunpack.c.l.b16 %v93
    %v238 = vunpack.c.l.b16 %v94
    %v239 = vunpack.c.l.b16 %v95
    %v240 = vunpack.c.l.b16 %v96
    %v241 = vunpack.c.l.b16 %v97
    %v242 = vunpack.c.l.b16 %v98
    %v243 = vunpack.c.l.b16 %v99
    %v244 = vunpack.c.l.b16 %v100
    %v245 = vunpack.c.l.b16 %v101
    %v246 = vunpack.c.l.b16 %v102
    %v247 = vpack.c.b16 %v184, %v183
    %v248 = vpack.c.b16 %v186, %v185
    %v249 = vpack.c.b16 %v188, %v187
    %v250 = vpack.c.b16 %v190, %v189
    %v251 = vpack.c.b16 %v192, %v191
    %v252 = vpack.c.b16 %v194, %v193
    %v253 = vpack.c.b16 %v196, %v195
    %v254 = vpack.c.b16 %v198, %v197
    %v255 = vpack.c.b16 %v200, %v199
    %v256 = vpack.c.b16 %v202, %v201
    %v257 = vpack.c.b16 %v204, %v203
    %v258 = vpack.c.b16 %v206, %v205
    %v259 = vpack.c.b16 %v208, %v207
    %v260 = vpack.c.b16 %v210, %v209
    %v261 = vpack.c.b16 %v212, %v211
    %v262 = vpack.c.b16 %v214, %v213
    %v263 = vpack.c.b16 %v216, %v215
    %v264 = vpack.c.b16 %v218, %v217
    %v265 = vpack.c.b16 %v220, %v219
    %v266 = vpack.c.b16 %v222, %v221
    %v267 = vpack.c.b16 %v224, %v223
    %v268 = vpack.c.b16 %v226, %v225
    %v269 = vpack.c.b16 %v228, %v227
    %v270 = vpack.c.b16 %v230, %v229
    %v271 = vpack.c.b16 %v232, %v231
    %v272 = vpack.c.b16 %v234, %v233
    %v273 = vpack.c.b16 %v236, %v235
    %v274 = vpack.c.b16 %v238, %v237
    %v275 = vpack.c.b16 %v240, %v239
    %v276 = vpack.c.b16 %v242, %v241
    %v277 = vpack.c.b16 %v244, %v243
    %v278 = vpack.c.b16 %v246, %v245
    %v327 = vunpack.c.l.b16 %v103
    %v328 = vunpack.c.l.b16 %v104
    %v329 = vunpack.c.l.b16 %v105
    %v330 = vunpack.c.l.b16 %v106
    %v331 = vunpack.c.l.b16 %v107
    %v332 = vunpack.c.l.b16 %v108
    %v333 = vunpack.c.l.b16 %v109
    %v334 = vunpack.c.l.b16 %v110
    %v335 = vunpack.c.l.b16 %v111
    %v336 = vunpack.c.l.b16 %v112
    %v337 = vunpack.c.l.b16 %v113
    %v338 = vunpack.c.l.b16 %v114
    %v339 = vunpack.c.l.b16 %v115
    %v340 = vunpack.c.l.b16 %v116
    %v341 = vunpack.c.l.b16 %v117
    %v342 = vunpack.c.l.b16 %v118
    %v343 = vpack.c.b16 %v328, %v327
    %v344 = vpack.c.b16 %v330, %v329
    %v345 = vpack.c.b16 %v332, %v331
    %v346 = vpack.c.b16 %v334, %v333
    %v347 = vpack.c.b16 %v336, %v335
    %v348 = vpack.c.b16 %v338, %v337
    %v349 = vpack.c.b16 %v340, %v339
    %v350 = vpack.c.b16 %v342, %v341
    %359 = vmatpush.bf16.msra.mxu0 %v350
    %360 = vmatpush.bf16.msra.mxu0 %v349
    %361 = vmatpush.bf16.msra.mxu0 %v348
    %362 = vmatpush.bf16.msra.mxu0 %v347
    %363 = vmatpush.bf16.msra.mxu0 %v346
    %364 = vmatpush.bf16.msra.mxu0 %v345
    %365 = vmatpush.bf16.msra.mxu0 %v344
    %366 = vmatpush.bf16.msra.mxu0 %v343
    %367 = vmatmul.bf16.gmra.mxu0 %v247
    %v368 = vpop.f32.mrf.mxu0
    %v369 = vadd.f32 0.0, %v368
    %v370 = vpop.f32.mrf.mxu0
    %v371 = vadd.f32 0.0, %v370
    %372 = vmatmul.bf16.gmra.mxu0 %v248
    %v373 = vpop.f32.mrf.mxu0
    %v374 = vadd.f32 0.0, %v373
    %v375 = vpop.f32.mrf.mxu0
    %v376 = vadd.f32 0.0, %v375
    %377 = vmatmul.bf16.gmra.mxu0 %v249
    %v378 = vpop.f32.mrf.mxu0
    %v379 = vadd.f32 0.0, %v378
    %v380 = vpop.f32.mrf.mxu0
    %v381 = vadd.f32 0.0, %v380
    %382 = vmatmul.bf16.gmra.mxu0 %v250
    %v383 = vpop.f32.mrf.mxu0
    %v384 = vadd.f32 0.0, %v383
    %v385 = vpop.f32.mrf.mxu0
    %v386 = vadd.f32 0.0, %v385
    %387 = vmatmul.bf16.gmra.mxu0 %v251
    %v388 = vpop.f32.mrf.mxu0
    %v389 = vadd.f32 0.0, %v388
    %v390 = vpop.f32.mrf.mxu0
    %v391 = vadd.f32 0.0, %v390
    %392 = vmatmul.bf16.gmra.mxu0 %v252
    %v393 = vpop.f32.mrf.mxu0
    %v394 = vadd.f32 0.0, %v393
    %v395 = vpop.f32.mrf.mxu0
    %v396 = vadd.f32 0.0, %v395
    %397 = vmatmul.bf16.gmra.mxu0 %v253
    %v398 = vpop.f32.mrf.mxu0
    %v399 = vadd.f32 0.0, %v398
    %v400 = vpop.f32.mrf.mxu0
    %v401 = vadd.f32 0.0, %v400
    %402 = vmatmul.bf16.gmra.mxu0 %v254
    %v403 = vpop.f32.mrf.mxu0
    %v404 = vadd.f32 0.0, %v403
    %v405 = vpop.f32.mrf.mxu0
    %v406 = vadd.f32 0.0, %v405
    %407 = vmatmul.bf16.gmra.mxu0 %v255
    %v408 = vpop.f32.mrf.mxu0
    %v409 = vadd.f32 0.0, %v408
    %v410 = vpop.f32.mrf.mxu0
    %v411 = vadd.f32 0.0, %v410
    %412 = vmatmul.bf16.gmra.mxu0 %v256
    %v413 = vpop.f32.mrf.mxu0
    %v414 = vadd.f32 0.0, %v413
    %v415 = vpop.f32.mrf.mxu0
    %v416 = vadd.f32 0.0, %v415
    %417 = vmatmul.bf16.gmra.mxu0 %v257
    %v418 = vpop.f32.mrf.mxu0
    %v419 = vadd.f32 0.0, %v418
    %v420 = vpop.f32.mrf.mxu0
    %v421 = vadd.f32 0.0, %v420
    %422 = vmatmul.bf16.gmra.mxu0 %v258
    %v423 = vpop.f32.mrf.mxu0
    %v424 = vadd.f32 0.0, %v423
    %v425 = vpop.f32.mrf.mxu0
    %v426 = vadd.f32 0.0, %v425
    %427 = vmatmul.bf16.gmra.mxu0 %v259
    %v428 = vpop.f32.mrf.mxu0
    %v429 = vadd.f32 0.0, %v428
    %v430 = vpop.f32.mrf.mxu0
    %v431 = vadd.f32 0.0, %v430
    %432 = vmatmul.bf16.gmra.mxu0 %v260
    %v433 = vpop.f32.mrf.mxu0
    %v434 = vadd.f32 0.0, %v433
    %v435 = vpop.f32.mrf.mxu0
    %v436 = vadd.f32 0.0, %v435
    %437 = vmatmul.bf16.gmra.mxu0 %v261
    %v438 = vpop.f32.mrf.mxu0
    %v439 = vadd.f32 0.0, %v438
    %v440 = vpop.f32.mrf.mxu0
    %v441 = vadd.f32 0.0, %v440
    %442 = vmatmul.bf16.gmra.mxu0 %v262
    %v443 = vpop.f32.mrf.mxu0
    %v444 = vadd.f32 0.0, %v443
    %v445 = vpop.f32.mrf.mxu0
    %v446 = vadd.f32 0.0, %v445
    %447 = vmatmul.bf16.gmra.mxu0 %v263
    %v448 = vpop.f32.mrf.mxu0
    %v449 = vadd.f32 0.0, %v448
    %v450 = vpop.f32.mrf.mxu0
    %v451 = vadd.f32 0.0, %v450
    %452 = vmatmul.bf16.gmra.mxu0 %v264
    %v453 = vpop.f32.mrf.mxu0
    %v454 = vadd.f32 0.0, %v453
    %v455 = vpop.f32.mrf.mxu0
    %v456 = vadd.f32 0.0, %v455
    %457 = vmatmul.bf16.gmra.mxu0 %v265
    %v458 = vpop.f32.mrf.mxu0
    %v459 = vadd.f32 0.0, %v458
    %v460 = vpop.f32.mrf.mxu0
    %v461 = vadd.f32 0.0, %v460
    %462 = vmatmul.bf16.gmra.mxu0 %v266
    %v463 = vpop.f32.mrf.mxu0
    %v464 = vadd.f32 0.0, %v463
    %v465 = vpop.f32.mrf.mxu0
    %v466 = vadd.f32 0.0, %v465
    %467 = vmatmul.bf16.gmra.mxu0 %v267
    %v468 = vpop.f32.mrf.mxu0
    %v469 = vadd.f32 0.0, %v468
    %v470 = vpop.f32.mrf.mxu0
    %v471 = vadd.f32 0.0, %v470
    %472 = vmatmul.bf16.gmra.mxu0 %v268
    %v473 = vpop.f32.mrf.mxu0
    %v474 = vadd.f32 0.0, %v473
    %v475 = vpop.f32.mrf.mxu0
    %v476 = vadd.f32 0.0, %v475
    %477 = vmatmul.bf16.gmra.mxu0 %v269
    %v478 = vpop.f32.mrf.mxu0
    %v479 = vadd.f32 0.0, %v478
    %v480 = vpop.f32.mrf.mxu0
    %v481 = vadd.f32 0.0, %v480
    %482 = vmatmul.bf16.gmra.mxu0 %v270
    %v483 = vpop.f32.mrf.mxu0
    %v484 = vadd.f32 0.0, %v483
    %v485 = vpop.f32.mrf.mxu0
    %v486 = vadd.f32 0.0, %v485
    %487 = vmatmul.bf16.gmra.mxu0 %v271
    %v488 = vpop.f32.mrf.mxu0
    %v489 = vadd.f32 0.0, %v488
    %v490 = vpop.f32.mrf.mxu0
    %v491 = vadd.f32 0.0, %v490
    %492 = vmatmul.bf16.gmra.mxu0 %v272
    %v493 = vpop.f32.mrf.mxu0
    %v494 = vadd.f32 0.0, %v493
    %v495 = vpop.f32.mrf.mxu0
    %v496 = vadd.f32 0.0, %v495
    %497 = vmatmul.bf16.gmra.mxu0 %v273
    %v498 = vpop.f32.mrf.mxu0
    %v499 = vadd.f32 0.0, %v498
    %v500 = vpop.f32.mrf.mxu0
    %v501 = vadd.f32 0.0, %v500
    %502 = vmatmul.bf16.gmra.mxu0 %v274
    %v503 = vpop.f32.mrf.mxu0
    %v504 = vadd.f32 0.0, %v503
    %v505 = vpop.f32.mrf.mxu0
    %v506 = vadd.f32 0.0, %v505
    %507 = vmatmul.bf16.gmra.mxu0 %v275
    %v508 = vpop.f32.mrf.mxu0
    %v509 = vadd.f32 0.0, %v508
    %v510 = vpop.f32.mrf.mxu0
    %v511 = vadd.f32 0.0, %v510
    %512 = vmatmul.bf16.gmra.mxu0 %v276
    %v513 = vpop.f32.mrf.mxu0
    %v514 = vadd.f32 0.0, %v513
    %v515 = vpop.f32.mrf.mxu0
    %v516 = vadd.f32 0.0, %v515
    %517 = vmatmul.bf16.gmra.mxu0 %v277
    %v518 = vpop.f32.mrf.mxu0
    %v519 = vadd.f32 0.0, %v518
    %v520 = vpop.f32.mrf.mxu0
    %v521 = vadd.f32 0.0, %v520
    %522 = vmatmul.bf16.gmra.mxu0 %v278
    %v523 = vpop.f32.mrf.mxu0
    %v524 = vadd.f32 0.0, %v523
    %v525 = vpop.f32.mrf.mxu0
    %v526 = vadd.f32 0.0, %v525
    %527 = vdwg.mxu0
    %v528 = vpack.c.bf16 %v371, %v369
    %v529 = vpack.c.bf16 %v376, %v374
    %v530 = vpack.c.bf16 %v381, %v379
    %v531 = vpack.c.bf16 %v386, %v384
    %v532 = vpack.c.bf16 %v391, %v389
    %v533 = vpack.c.bf16 %v396, %v394
    %v534 = vpack.c.bf16 %v401, %v399
    %v535 = vpack.c.bf16 %v406, %v404
    %v536 = vpack.c.bf16 %v411, %v409
    %v537 = vpack.c.bf16 %v416, %v414
    %v538 = vpack.c.bf16 %v421, %v419
    %v539 = vpack.c.bf16 %v426, %v424
    %v540 = vpack.c.bf16 %v431, %v429
    %v541 = vpack.c.bf16 %v436, %v434
    %v542 = vpack.c.bf16 %v441, %v439
    %v543 = vpack.c.bf16 %v446, %v444
    %v544 = vpack.c.bf16 %v451, %v449
    %v545 = vpack.c.bf16 %v456, %v454
    %v546 = vpack.c.bf16 %v461, %v459
    %v547 = vpack.c.bf16 %v466, %v464
    %v548 = vpack.c.bf16 %v471, %v469
    %v549 = vpack.c.bf16 %v476, %v474
    %v550 = vpack.c.bf16 %v481, %v479
    %v551 = vpack.c.bf16 %v486, %v484
    %v552 = vpack.c.bf16 %v491, %v489
    %v553 = vpack.c.bf16 %v496, %v494
    %v554 = vpack.c.bf16 %v501, %v499
    %v555 = vpack.c.bf16 %v506, %v504
    %v556 = vpack.c.bf16 %v511, %v509
    %v557 = vpack.c.bf16 %v516, %v514
    %v558 = vpack.c.bf16 %v521, %v519
    %v559 = vpack.c.bf16 %v526, %v524
    %v560 = vld [vmem:[#allocation2] sm:$0xff]
    %v561 = vld [vmem:[#allocation2 + $0x8] sm:$0xff]
    %v562 = vld [vmem:[#allocation2 + $0x10] sm:$0xff]
    %v563 = vld [vmem:[#allocation2 + $0x18] sm:$0xff]
    %v564 = vld [vmem:[#allocation2 + $0x20] sm:$0xff]
    %v565 = vld [vmem:[#allocation2 + $0x28] sm:$0xff]
    %v566 = vld [vmem:[#allocation2 + $0x30] sm:$0xff]
    %v567 = vld [vmem:[#allocation2 + $0x38] sm:$0xff]
    %v568 = vld [vmem:[#allocation2 + $0x40] sm:$0xff]
    %v569 = vld [vmem:[#allocation2 + $0x48] sm:$0xff]
    %v570 = vld [vmem:[#allocation2 + $0x50] sm:$0xff]
    %v571 = vld [vmem:[#allocation2 + $0x58] sm:$0xff]
    %v572 = vld [vmem:[#allocation2 + $0x60] sm:$0xff]
    %v573 = vld [vmem:[#allocation2 + $0x68] sm:$0xff]
    %v574 = vld [vmem:[#allocation2 + $0x70] sm:$0xff]
    %v575 = vld [vmem:[#allocation2 + $0x78] sm:$0xff]
    %v576 = vld [vmem:[#allocation2 + $0x80] sm:$0xff]
    %v577 = vld [vmem:[#allocation2 + $0x88] sm:$0xff]
    %v578 = vld [vmem:[#allocation2 + $0x90] sm:$0xff]
    %v579 = vld [vmem:[#allocation2 + $0x98] sm:$0xff]
    %v580 = vld [vmem:[#allocation2 + $0xa0] sm:$0xff]
    %v581 = vld [vmem:[#allocation2 + $0xa8] sm:$0xff]
    %v582 = vld [vmem:[#allocation2 + $0xb0] sm:$0xff]
    %v583 = vld [vmem:[#allocation2 + $0xb8] sm:$0xff]
    %v584 = vld [vmem:[#allocation2 + $0xc0] sm:$0xff]
    %v585 = vld [vmem:[#allocation2 + $0xc8] sm:$0xff]
    %v586 = vld [vmem:[#allocation2 + $0xd0] sm:$0xff]
    %v587 = vld [vmem:[#allocation2 + $0xd8] sm:$0xff]
    %v588 = vld [vmem:[#allocation2 + $0xe0] sm:$0xff]
    %v589 = vld [vmem:[#allocation2 + $0xe8] sm:$0xff]
    %v590 = vld [vmem:[#allocation2 + $0xf0] sm:$0xff]
    %v591 = vld [vmem:[#allocation2 + $0xf8] sm:$0xff]
    %v592 = vld [vmem:[#allocation2 + $0x100] sm:$0xff]
    %v593 = vld [vmem:[#allocation2 + $0x108] sm:$0xff]
    %v594 = vld [vmem:[#allocation2 + $0x110] sm:$0xff]
    %v595 = vld [vmem:[#allocation2 + $0x118] sm:$0xff]
    %v596 = vld [vmem:[#allocation2 + $0x120] sm:$0xff]
    %v597 = vld [vmem:[#allocation2 + $0x128] sm:$0xff]
    %v598 = vld [vmem:[#allocation2 + $0x130] sm:$0xff]
    %v599 = vld [vmem:[#allocation2 + $0x138] sm:$0xff]
    %v600 = vld [vmem:[#allocation2 + $0x140] sm:$0xff]
    %v601 = vld [vmem:[#allocation2 + $0x148] sm:$0xff]
    %v602 = vld [vmem:[#allocation2 + $0x150] sm:$0xff]
    %v603 = vld [vmem:[#allocation2 + $0x158] sm:$0xff]
    %v604 = vld [vmem:[#allocation2 + $0x160] sm:$0xff]
    %v605 = vld [vmem:[#allocation2 + $0x168] sm:$0xff]
    %v606 = vld [vmem:[#allocation2 + $0x170] sm:$0xff]
    %v607 = vld [vmem:[#allocation2 + $0x178] sm:$0xff]
    %v608 = vld [vmem:[#allocation2 + $0x180] sm:$0xff]
    %v609 = vld [vmem:[#allocation2 + $0x188] sm:$0xff]
    %v610 = vld [vmem:[#allocation2 + $0x190] sm:$0xff]
    %v611 = vld [vmem:[#allocation2 + $0x198] sm:$0xff]
    %v612 = vld [vmem:[#allocation2 + $0x1a0] sm:$0xff]
    %v613 = vld [vmem:[#allocation2 + $0x1a8] sm:$0xff]
    %v614 = vld [vmem:[#allocation2 + $0x1b0] sm:$0xff]
    %v615 = vld [vmem:[#allocation2 + $0x1b8] sm:$0xff]
    %v616 = vld [vmem:[#allocation2 + $0x1c0] sm:$0xff]
    %v617 = vld [vmem:[#allocation2 + $0x1c8] sm:$0xff]
    %v618 = vld [vmem:[#allocation2 + $0x1d0] sm:$0xff]
    %v619 = vld [vmem:[#allocation2 + $0x1d8] sm:$0xff]
    %v620 = vld [vmem:[#allocation2 + $0x1e0] sm:$0xff]
    %v621 = vld [vmem:[#allocation2 + $0x1e8] sm:$0xff]
    %v622 = vld [vmem:[#allocation2 + $0x1f0] sm:$0xff]
    %v623 = vld [vmem:[#allocation2 + $0x1f8] sm:$0xff]
    %v624 = vld [vmem:[#allocation2 + $0x200] sm:$0xff]
    %v625 = vld [vmem:[#allocation2 + $0x208] sm:$0xff]
    %v626 = vld [vmem:[#allocation2 + $0x210] sm:$0xff]
    %v627 = vld [vmem:[#allocation2 + $0x218] sm:$0xff]
    %v628 = vld [vmem:[#allocation2 + $0x220] sm:$0xff]
    %v629 = vld [vmem:[#allocation2 + $0x228] sm:$0xff]
    %v630 = vld [vmem:[#allocation2 + $0x230] sm:$0xff]
    %v631 = vld [vmem:[#allocation2 + $0x238] sm:$0xff]
    %v632 = vld [vmem:[#allocation2 + $0x240] sm:$0xff]
    %v633 = vld [vmem:[#allocation2 + $0x248] sm:$0xff]
    %v634 = vld [vmem:[#allocation2 + $0x250] sm:$0xff]
    %v635 = vld [vmem:[#allocation2 + $0x258] sm:$0xff]
    %v636 = vld [vmem:[#allocation2 + $0x260] sm:$0xff]
    %v637 = vld [vmem:[#allocation2 + $0x268] sm:$0xff]
    %v638 = vld [vmem:[#allocation2 + $0x270] sm:$0xff]
    %v639 = vld [vmem:[#allocation2 + $0x278] sm:$0xff]
    %v640 = vld [vmem:[#allocation2 + $0x280] sm:$0xff]
    %v641 = vld [vmem:[#allocation2 + $0x288] sm:$0xff]
    %v642 = vld [vmem:[#allocation2 + $0x290] sm:$0xff]
    %v643 = vld [vmem:[#allocation2 + $0x298] sm:$0xff]
    %v644 = vld [vmem:[#allocation2 + $0x2a0] sm:$0xff]
    %v645 = vld [vmem:[#allocation2 + $0x2a8] sm:$0xff]
    %v646 = vld [vmem:[#allocation2 + $0x2b0] sm:$0xff]
    %v647 = vld [vmem:[#allocation2 + $0x2b8] sm:$0xff]
    %v648 = vld [vmem:[#allocation2 + $0x2c0] sm:$0xff]
    %v649 = vld [vmem:[#allocation2 + $0x2c8] sm:$0xff]
    %v650 = vld [vmem:[#allocation2 + $0x2d0] sm:$0xff]
    %v651 = vld [vmem:[#allocation2 + $0x2d8] sm:$0xff]
    %v652 = vld [vmem:[#allocation2 + $0x2e0] sm:$0xff]
    %v653 = vld [vmem:[#allocation2 + $0x2e8] sm:$0xff]
    %v654 = vld [vmem:[#allocation2 + $0x2f0] sm:$0xff]
    %v655 = vld [vmem:[#allocation2 + $0x2f8] sm:$0xff]
    %v656 = vld [vmem:[#allocation2 + $0x300] sm:$0xff]
    %v657 = vld [vmem:[#allocation2 + $0x308] sm:$0xff]
    %v658 = vld [vmem:[#allocation2 + $0x310] sm:$0xff]
    %v659 = vld [vmem:[#allocation2 + $0x318] sm:$0xff]
    %v660 = vld [vmem:[#allocation2 + $0x320] sm:$0xff]
    %v661 = vld [vmem:[#allocation2 + $0x328] sm:$0xff]
    %v662 = vld [vmem:[#allocation2 + $0x330] sm:$0xff]
    %v663 = vld [vmem:[#allocation2 + $0x338] sm:$0xff]
    %v664 = vld [vmem:[#allocation2 + $0x340] sm:$0xff]
    %v665 = vld [vmem:[#allocation2 + $0x348] sm:$0xff]
    %v666 = vld [vmem:[#allocation2 + $0x350] sm:$0xff]
    %v667 = vld [vmem:[#allocation2 + $0x358] sm:$0xff]
    %v668 = vld [vmem:[#allocation2 + $0x360] sm:$0xff]
    %v669 = vld [vmem:[#allocation2 + $0x368] sm:$0xff]
    %v670 = vld [vmem:[#allocation2 + $0x370] sm:$0xff]
    %v671 = vld [vmem:[#allocation2 + $0x378] sm:$0xff]
    %v672 = vld [vmem:[#allocation2 + $0x380] sm:$0xff]
    %v673 = vld [vmem:[#allocation2 + $0x388] sm:$0xff]
    %v674 = vld [vmem:[#allocation2 + $0x390] sm:$0xff]
    %v675 = vld [vmem:[#allocation2 + $0x398] sm:$0xff]
    %v676 = vld [vmem:[#allocation2 + $0x3a0] sm:$0xff]
    %v677 = vld [vmem:[#allocation2 + $0x3a8] sm:$0xff]
    %v678 = vld [vmem:[#allocation2 + $0x3b0] sm:$0xff]
    %v679 = vld [vmem:[#allocation2 + $0x3b8] sm:$0xff]
    %v680 = vld [vmem:[#allocation2 + $0x3c0] sm:$0xff]
    %v681 = vld [vmem:[#allocation2 + $0x3c8] sm:$0xff]
    %v682 = vld [vmem:[#allocation2 + $0x3d0] sm:$0xff]
    %v683 = vld [vmem:[#allocation2 + $0x3d8] sm:$0xff]
    %v684 = vld [vmem:[#allocation2 + $0x3e0] sm:$0xff]
    %v685 = vld [vmem:[#allocation2 + $0x3e8] sm:$0xff]
    %v686 = vld [vmem:[#allocation2 + $0x3f0] sm:$0xff]
    %v687 = vld [vmem:[#allocation2 + $0x3f8] sm:$0xff]
    %v688 = vld [vmem:[%s3] sm:$0x1]
    %v690 = vperm.slane %v688, 0
    %v820 = vunpack.c.l.b16 %v560
    %v821 = vunpack.c.h.b16 %v560
    %v822 = vunpack.c.l.b16 %v561
    %v823 = vunpack.c.h.b16 %v561
    %v824 = vunpack.c.l.b16 %v562
    %v825 = vunpack.c.h.b16 %v562
    %v826 = vunpack.c.l.b16 %v563
    %v827 = vunpack.c.h.b16 %v563
    %v828 = vunpack.c.l.b16 %v564
    %v829 = vunpack.c.h.b16 %v564
    %v830 = vunpack.c.l.b16 %v565
    %v831 = vunpack.c.h.b16 %v565
    %v832 = vunpack.c.l.b16 %v566
    %v833 = vunpack.c.h.b16 %v566
    %v834 = vunpack.c.l.b16 %v567
    %v835 = vunpack.c.h.b16 %v567
    %v836 = vunpack.c.l.b16 %v568
    %v837 = vunpack.c.h.b16 %v568
    %v838 = vunpack.c.l.b16 %v569
    %v839 = vunpack.c.h.b16 %v569
    %v840 = vunpack.c.l.b16 %v570
    %v841 = vunpack.c.h.b16 %v570
    %v842 = vunpack.c.l.b16 %v571
    %v843 = vunpack.c.h.b16 %v571
    %v844 = vunpack.c.l.b16 %v572
    %v845 = vunpack.c.h.b16 %v572
    %v846 = vunpack.c.l.b16 %v573
    %v847 = vunpack.c.h.b16 %v573
    %v848 = vunpack.c.l.b16 %v574
    %v849 = vunpack.c.h.b16 %v574
    %v850 = vunpack.c.l.b16 %v575
    %v851 = vunpack.c.h.b16 %v575
    %v852 = vunpack.c.l.b16 %v576
    %v853 = vunpack.c.h.b16 %v576
    %v854 = vunpack.c.l.b16 %v577
    %v855 = vunpack.c.h.b16 %v577
    %v856 = vunpack.c.l.b16 %v578
    %v857 = vunpack.c.h.b16 %v578
    %v858 = vunpack.c.l.b16 %v579
    %v859 = vunpack.c.h.b16 %v579
    %v860 = vunpack.c.l.b16 %v580
    %v861 = vunpack.c.h.b16 %v580
    %v862 = vunpack.c.l.b16 %v581
    %v863 = vunpack.c.h.b16 %v581
    %v864 = vunpack.c.l.b16 %v582
    %v865 = vunpack.c.h.b16 %v582
    %v866 = vunpack.c.l.b16 %v583
    %v867 = vunpack.c.h.b16 %v583
    %v868 = vunpack.c.l.b16 %v584
    %v869 = vunpack.c.h.b16 %v584
    %v870 = vunpack.c.l.b16 %v585
    %v871 = vunpack.c.h.b16 %v585
    %v872 = vunpack.c.l.b16 %v586
    %v873 = vunpack.c.h.b16 %v586
    %v874 = vunpack.c.l.b16 %v587
    %v875 = vunpack.c.h.b16 %v587
    %v876 = vunpack.c.l.b16 %v588
    %v877 = vunpack.c.h.b16 %v588
    %v878 = vunpack.c.l.b16 %v589
    %v879 = vunpack.c.h.b16 %v589
    %v880 = vunpack.c.l.b16 %v590
    %v881 = vunpack.c.h.b16 %v590
    %v882 = vunpack.c.l.b16 %v591
    %v883 = vunpack.c.h.b16 %v591
    %v884 = vunpack.c.l.b16 %v592
    %v885 = vunpack.c.h.b16 %v592
    %v886 = vunpack.c.l.b16 %v593
    %v887 = vunpack.c.h.b16 %v593
    %v888 = vunpack.c.l.b16 %v594
    %v889 = vunpack.c.h.b16 %v594
    %v890 = vunpack.c.l.b16 %v595
    %v891 = vunpack.c.h.b16 %v595
    %v892 = vunpack.c.l.b16 %v596
    %v893 = vunpack.c.h.b16 %v596
    %v894 = vunpack.c.l.b16 %v597
    %v895 = vunpack.c.h.b16 %v597
    %v896 = vunpack.c.l.b16 %v598
    %v897 = vunpack.c.h.b16 %v598
    %v898 = vunpack.c.l.b16 %v599
    %v899 = vunpack.c.h.b16 %v599
    %v900 = vunpack.c.l.b16 %v600
    %v901 = vunpack.c.h.b16 %v600
    %v902 = vunpack.c.l.b16 %v601
    %v903 = vunpack.c.h.b16 %v601
    %v904 = vunpack.c.l.b16 %v602
    %v905 = vunpack.c.h.b16 %v602
    %v906 = vunpack.c.l.b16 %v603
    %v907 = vunpack.c.h.b16 %v603
    %v908 = vunpack.c.l.b16 %v604
    %v909 = vunpack.c.h.b16 %v604
    %v910 = vunpack.c.l.b16 %v605
    %v911 = vunpack.c.h.b16 %v605
    %v912 = vunpack.c.l.b16 %v606
    %v913 = vunpack.c.h.b16 %v606
    %v914 = vunpack.c.l.b16 %v607
    %v915 = vunpack.c.h.b16 %v607
    %v916 = vunpack.c.l.b16 %v608
    %v917 = vunpack.c.h.b16 %v608
    %v918 = vunpack.c.l.b16 %v609
    %v919 = vunpack.c.h.b16 %v609
    %v920 = vunpack.c.l.b16 %v610
    %v921 = vunpack.c.h.b16 %v610
    %v922 = vunpack.c.l.b16 %v611
    %v923 = vunpack.c.h.b16 %v611
    %v924 = vunpack.c.l.b16 %v612
    %v925 = vunpack.c.h.b16 %v612
    %v926 = vunpack.c.l.b16 %v613
    %v927 = vunpack.c.h.b16 %v613
    %v928 = vunpack.c.l.b16 %v614
    %v929 = vunpack.c.h.b16 %v614
    %v930 = vunpack.c.l.b16 %v615
    %v931 = vunpack.c.h.b16 %v615
    %v932 = vunpack.c.l.b16 %v616
    %v933 = vunpack.c.h.b16 %v616
    %v934 = vunpack.c.l.b16 %v617
    %v935 = vunpack.c.h.b16 %v617
    %v936 = vunpack.c.l.b16 %v618
    %v937 = vunpack.c.h.b16 %v618
    %v938 = vunpack.c.l.b16 %v619
    %v939 = vunpack.c.h.b16 %v619
    %v940 = vunpack.c.l.b16 %v620
    %v941 = vunpack.c.h.b16 %v620
    %v942 = vunpack.c.l.b16 %v621
    %v943 = vunpack.c.h.b16 %v621
    %v944 = vunpack.c.l.b16 %v622
    %v945 = vunpack.c.h.b16 %v622
    %v946 = vunpack.c.l.b16 %v623
    %v947 = vunpack.c.h.b16 %v623
    %v948 = vunpack.c.l.b16 %v624
    %v949 = vunpack.c.h.b16 %v624
    %v950 = vunpack.c.l.b16 %v625
    %v951 = vunpack.c.h.b16 %v625
    %v952 = vunpack.c.l.b16 %v626
    %v953 = vunpack.c.h.b16 %v626
    %v954 = vunpack.c.l.b16 %v627
    %v955 = vunpack.c.h.b16 %v627
    %v956 = vunpack.c.l.b16 %v628
    %v957 = vunpack.c.h.b16 %v628
    %v958 = vunpack.c.l.b16 %v629
    %v959 = vunpack.c.h.b16 %v629
    %v960 = vunpack.c.l.b16 %v630
    %v961 = vunpack.c.h.b16 %v630
    %v962 = vunpack.c.l.b16 %v631
    %v963 = vunpack.c.h.b16 %v631
    %v964 = vunpack.c.l.b16 %v632
    %v965 = vunpack.c.h.b16 %v632
    %v966 = vunpack.c.l.b16 %v633
    %v967 = vunpack.c.h.b16 %v633
    %v968 = vunpack.c.l.b16 %v634
    %v969 = vunpack.c.h.b16 %v634
    %v970 = vunpack.c.l.b16 %v635
    %v971 = vunpack.c.h.b16 %v635
    %v972 = vunpack.c.l.b16 %v636
    %v973 = vunpack.c.h.b16 %v636
    %v974 = vunpack.c.l.b16 %v637
    %v975 = vunpack.c.h.b16 %v637
    %v976 = vunpack.c.l.b16 %v638
    %v977 = vunpack.c.h.b16 %v638
    %v978 = vunpack.c.l.b16 %v639
    %v979 = vunpack.c.h.b16 %v639
    %v980 = vunpack.c.l.b16 %v640
    %v981 = vunpack.c.h.b16 %v640
    %v982 = vunpack.c.l.b16 %v641
    %v983 = vunpack.c.h.b16 %v641
    %v984 = vunpack.c.l.b16 %v642
    %v985 = vunpack.c.h.b16 %v642
    %v986 = vunpack.c.l.b16 %v643
    %v987 = vunpack.c.h.b16 %v643
    %v988 = vunpack.c.l.b16 %v644
    %v989 = vunpack.c.h.b16 %v644
    %v990 = vunpack.c.l.b16 %v645
    %v991 = vunpack.c.h.b16 %v645
    %v992 = vunpack.c.l.b16 %v646
    %v993 = vunpack.c.h.b16 %v646
    %v994 = vunpack.c.l.b16 %v647
    %v995 = vunpack.c.h.b16 %v647
    %v996 = vunpack.c.l.b16 %v648
    %v997 = vunpack.c.h.b16 %v648
    %v998 = vunpack.c.l.b16 %v649
    %v999 = vunpack.c.h.b16 %v649
    %v1000 = vunpack.c.l.b16 %v650
    %v1001 = vunpack.c.h.b16 %v650
    %v1002 = vunpack.c.l.b16 %v651
    %v1003 = vunpack.c.h.b16 %v651
    %v1004 = vunpack.c.l.b16 %v652
    %v1005 = vunpack.c.h.b16 %v652
    %v1006 = vunpack.c.l.b16 %v653
    %v1007 = vunpack.c.h.b16 %v653
    %v1008 = vunpack.c.l.b16 %v654
    %v1009 = vunpack.c.h.b16 %v654
    %v1010 = vunpack.c.l.b16 %v655
    %v1011 = vunpack.c.h.b16 %v655
    %v1012 = vunpack.c.l.b16 %v656
    %v1013 = vunpack.c.h.b16 %v656
    %v1014 = vunpack.c.l.b16 %v657
    %v1015 = vunpack.c.h.b16 %v657
    %v1016 = vunpack.c.l.b16 %v658
    %v1017 = vunpack.c.h.b16 %v658
    %v1018 = vunpack.c.l.b16 %v659
    %v1019 = vunpack.c.h.b16 %v659
    %v1020 = vunpack.c.l.b16 %v660
    %v1021 = vunpack.c.h.b16 %v660
    %v1022 = vunpack.c.l.b16 %v661
    %v1023 = vunpack.c.h.b16 %v661
    %v1024 = vunpack.c.l.b16 %v662
    %v1025 = vunpack.c.h.b16 %v662
    %v1026 = vunpack.c.l.b16 %v663
    %v1027 = vunpack.c.h.b16 %v663
    %v1028 = vunpack.c.l.b16 %v664
    %v1029 = vunpack.c.h.b16 %v664
    %v1030 = vunpack.c.l.b16 %v665
    %v1031 = vunpack.c.h.b16 %v665
    %v1032 = vunpack.c.l.b16 %v666
    %v1033 = vunpack.c.h.b16 %v666
    %v1034 = vunpack.c.l.b16 %v667
    %v1035 = vunpack.c.h.b16 %v667
    %v1036 = vunpack.c.l.b16 %v668
    %v1037 = vunpack.c.h.b16 %v668
    %v1038 = vunpack.c.l.b16 %v669
    %v1039 = vunpack.c.h.b16 %v669
    %v1040 = vunpack.c.l.b16 %v670
    %v1041 = vunpack.c.h.b16 %v670
    %v1042 = vunpack.c.l.b16 %v671
    %v1043 = vunpack.c.h.b16 %v671
    %v1044 = vunpack.c.l.b16 %v672
    %v1045 = vunpack.c.h.b16 %v672
    %v1046 = vunpack.c.l.b16 %v673
    %v1047 = vunpack.c.h.b16 %v673
    %v1048 = vunpack.c.l.b16 %v674
    %v1049 = vunpack.c.h.b16 %v674
    %v1050 = vunpack.c.l.b16 %v675
    %v1051 = vunpack.c.h.b16 %v675
    %v1052 = vunpack.c.l.b16 %v676
    %v1053 = vunpack.c.h.b16 %v676
    %v1054 = vunpack.c.l.b16 %v677
    %v1055 = vunpack.c.h.b16 %v677
    %v1056 = vunpack.c.l.b16 %v678
    %v1057 = vunpack.c.h.b16 %v678
    %v1058 = vunpack.c.l.b16 %v679
    %v1059 = vunpack.c.h.b16 %v679
    %v1060 = vunpack.c.l.b16 %v680
    %v1061 = vunpack.c.h.b16 %v680
    %v1062 = vunpack.c.l.b16 %v681
    %v1063 = vunpack.c.h.b16 %v681
    %v1064 = vunpack.c.l.b16 %v682
    %v1065 = vunpack.c.h.b16 %v682
    %v1066 = vunpack.c.l.b16 %v683
    %v1067 = vunpack.c.h.b16 %v683
    %v1068 = vunpack.c.l.b16 %v684
    %v1069 = vunpack.c.h.b16 %v684
    %v1070 = vunpack.c.l.b16 %v685
    %v1071 = vunpack.c.h.b16 %v685
    %v1072 = vunpack.c.l.b16 %v686
    %v1073 = vunpack.c.h.b16 %v686
    %v1074 = vunpack.c.l.b16 %v687
    %v1075 = vunpack.c.h.b16 %v687
    %v1076 = vpack.c.b16 %v824, %v820
    %v1077 = vpack.c.b16 %v825, %v821
    %v1078 = vpack.c.b16 %v826, %v822
    %v1079 = vpack.c.b16 %v827, %v823
    %v1080 = vpack.c.b16 %v832, %v828
    %v1081 = vpack.c.b16 %v833, %v829
    %v1082 = vpack.c.b16 %v834, %v830
    %v1083 = vpack.c.b16 %v835, %v831
    %v1084 = vpack.c.b16 %v840, %v836
    %v1085 = vpack.c.b16 %v841, %v837
    %v1086 = vpack.c.b16 %v842, %v838
    %v1087 = vpack.c.b16 %v843, %v839
    %v1088 = vpack.c.b16 %v848, %v844
    %v1089 = vpack.c.b16 %v849, %v845
    %v1090 = vpack.c.b16 %v850, %v846
    %v1091 = vpack.c.b16 %v851, %v847
    %v1092 = vpack.c.b16 %v856, %v852
    %v1093 = vpack.c.b16 %v857, %v853
    %v1094 = vpack.c.b16 %v858, %v854
    %v1095 = vpack.c.b16 %v859, %v855
    %v1096 = vpack.c.b16 %v864, %v860
    %v1097 = vpack.c.b16 %v865, %v861
    %v1098 = vpack.c.b16 %v866, %v862
    %v1099 = vpack.c.b16 %v867, %v863
    %v1100 = vpack.c.b16 %v872, %v868
    %v1101 = vpack.c.b16 %v873, %v869
    %v1102 = vpack.c.b16 %v874, %v870
    %v1103 = vpack.c.b16 %v875, %v871
    %v1104 = vpack.c.b16 %v880, %v876
    %v1105 = vpack.c.b16 %v881, %v877
    %v1106 = vpack.c.b16 %v882, %v878
    %v1107 = vpack.c.b16 %v883, %v879
    %v1108 = vpack.c.b16 %v888, %v884
    %v1109 = vpack.c.b16 %v889, %v885
    %v1110 = vpack.c.b16 %v890, %v886
    %v1111 = vpack.c.b16 %v891, %v887
    %v1112 = vpack.c.b16 %v896, %v892
    %v1113 = vpack.c.b16 %v897, %v893
    %v1114 = vpack.c.b16 %v898, %v894
    %v1115 = vpack.c.b16 %v899, %v895
    %v1116 = vpack.c.b16 %v904, %v900
    %v1117 = vpack.c.b16 %v905, %v901
    %v1118 = vpack.c.b16 %v906, %v902
    %v1119 = vpack.c.b16 %v907, %v903
    %v1120 = vpack.c.b16 %v912, %v908
    %v1121 = vpack.c.b16 %v913, %v909
    %v1122 = vpack.c.b16 %v914, %v910
    %v1123 = vpack.c.b16 %v915, %v911
    %v1124 = vpack.c.b16 %v920, %v916
    %v1125 = vpack.c.b16 %v921, %v917
    %v1126 = vpack.c.b16 %v922, %v918
    %v1127 = vpack.c.b16 %v923, %v919
    %v1128 = vpack.c.b16 %v928, %v924
    %v1129 = vpack.c.b16 %v929, %v925
    %v1130 = vpack.c.b16 %v930, %v926
    %v1131 = vpack.c.b16 %v931, %v927
    %v1132 = vpack.c.b16 %v936, %v932
    %v1133 = vpack.c.b16 %v937, %v933
    %v1134 = vpack.c.b16 %v938, %v934
    %v1135 = vpack.c.b16 %v939, %v935
    %v1136 = vpack.c.b16 %v944, %v940
    %v1137 = vpack.c.b16 %v945, %v941
    %v1138 = vpack.c.b16 %v946, %v942
    %v1139 = vpack.c.b16 %v947, %v943
    %v1140 = vpack.c.b16 %v952, %v948
    %v1141 = vpack.c.b16 %v953, %v949
    %v1142 = vpack.c.b16 %v954, %v950
    %v1143 = vpack.c.b16 %v955, %v951
    %v1144 = vpack.c.b16 %v960, %v956
    %v1145 = vpack.c.b16 %v961, %v957
    %v1146 = vpack.c.b16 %v962, %v958
    %v1147 = vpack.c.b16 %v963, %v959
    %v1148 = vpack.c.b16 %v968, %v964
    %v1149 = vpack.c.b16 %v969, %v965
    %v1150 = vpack.c.b16 %v970, %v966
    %v1151 = vpack.c.b16 %v971, %v967
    %v1152 = vpack.c.b16 %v976, %v972
    %v1153 = vpack.c.b16 %v977, %v973
    %v1154 = vpack.c.b16 %v978, %v974
    %v1155 = vpack.c.b16 %v979, %v975
    %v1156 = vpack.c.b16 %v984, %v980
    %v1157 = vpack.c.b16 %v985, %v981
    %v1158 = vpack.c.b16 %v986, %v982
    %v1159 = vpack.c.b16 %v987, %v983
    %v1160 = vpack.c.b16 %v992, %v988
    %v1161 = vpack.c.b16 %v993, %v989
    %v1162 = vpack.c.b16 %v994, %v990
    %v1163 = vpack.c.b16 %v995, %v991
    %v1164 = vpack.c.b16 %v1000, %v996
    %v1165 = vpack.c.b16 %v1001, %v997
    %v1166 = vpack.c.b16 %v1002, %v998
    %v1167 = vpack.c.b16 %v1003, %v999
    %v1168 = vpack.c.b16 %v1008, %v1004
    %v1169 = vpack.c.b16 %v1009, %v1005
    %v1170 = vpack.c.b16 %v1010, %v1006
    %v1171 = vpack.c.b16 %v1011, %v1007
    %v1172 = vpack.c.b16 %v1016, %v1012
    %v1173 = vpack.c.b16 %v1017, %v1013
    %v1174 = vpack.c.b16 %v1018, %v1014
    %v1175 = vpack.c.b16 %v1019, %v1015
    %v1176 = vpack.c.b16 %v1024, %v1020
    %v1177 = vpack.c.b16 %v1025, %v1021
    %v1178 = vpack.c.b16 %v1026, %v1022
    %v1179 = vpack.c.b16 %v1027, %v1023
    %v1180 = vpack.c.b16 %v1032, %v1028
    %v1181 = vpack.c.b16 %v1033, %v1029
    %v1182 = vpack.c.b16 %v1034, %v1030
    %v1183 = vpack.c.b16 %v1035, %v1031
    %v1184 = vpack.c.b16 %v1040, %v1036
    %v1185 = vpack.c.b16 %v1041, %v1037
    %v1186 = vpack.c.b16 %v1042, %v1038
    %v1187 = vpack.c.b16 %v1043, %v1039
    %v1188 = vpack.c.b16 %v1048, %v1044
    %v1189 = vpack.c.b16 %v1049, %v1045
    %v1190 = vpack.c.b16 %v1050, %v1046
    %v1191 = vpack.c.b16 %v1051, %v1047
    %v1192 = vpack.c.b16 %v1056, %v1052
    %v1193 = vpack.c.b16 %v1057, %v1053
    %v1194 = vpack.c.b16 %v1058, %v1054
    %v1195 = vpack.c.b16 %v1059, %v1055
    %v1196 = vpack.c.b16 %v1064, %v1060
    %v1197 = vpack.c.b16 %v1065, %v1061
    %v1198 = vpack.c.b16 %v1066, %v1062
    %v1199 = vpack.c.b16 %v1067, %v1063
    %v1200 = vpack.c.b16 %v1072, %v1068
    %v1201 = vpack.c.b16 %v1073, %v1069
    %v1202 = vpack.c.b16 %v1074, %v1070
    %v1203 = vpack.c.b16 %v1075, %v1071
    %1332 = vmatpush.bf16.msra.mxu0 %v535
    %1333 = vmatpush.bf16.msra.mxu0 %v534
    %1334 = vmatpush.bf16.msra.mxu0 %v533
    %1335 = vmatpush.bf16.msra.mxu0 %v532
    %1336 = vmatpush.bf16.msra.mxu0 %v531
    %1337 = vmatpush.bf16.msra.mxu0 %v530
    %1338 = vmatpush.bf16.msra.mxu0 %v529
    %1339 = vmatpush.bf16.msra.mxu0 %v528
    %1340 = vmatmul.bf16.gmra.mxu0 %v1076
    %v1341 = vpop.f32.mrf.mxu0
    %v1342 = vadd.f32 %v690, %v1341
    %v1343 = vpop.f32.mrf.mxu0
    %v1344 = vadd.f32 %v690, %v1343
    %1345 = vmatmul.bf16.gmra.mxu0 %v1080
    %v1346 = vpop.f32.mrf.mxu0
    %v1347 = vadd.f32 %v690, %v1346
    %v1348 = vpop.f32.mrf.mxu0
    %v1349 = vadd.f32 %v690, %v1348
    %1350 = vmatmul.bf16.gmra.mxu0 %v1084
    %v1351 = vpop.f32.mrf.mxu0
    %v1352 = vadd.f32 %v690, %v1351
    %v1353 = vpop.f32.mrf.mxu0
    %v1354 = vadd.f32 %v690, %v1353
    %1355 = vmatmul.bf16.gmra.mxu0 %v1088
    %v1356 = vpop.f32.mrf.mxu0
    %v1357 = vadd.f32 %v690, %v1356
    %v1358 = vpop.f32.mrf.mxu0
    %v1359 = vadd.f32 %v690, %v1358
    %1360 = vmatmul.bf16.gmra.mxu0 %v1092
    %v1361 = vpop.f32.mrf.mxu0
    %v1362 = vadd.f32 %v690, %v1361
    %v1363 = vpop.f32.mrf.mxu0
    %v1364 = vadd.f32 %v690, %v1363
    %1365 = vmatmul.bf16.gmra.mxu0 %v1096
    %v1366 = vpop.f32.mrf.mxu0
    %v1367 = vadd.f32 %v690, %v1366
    %v1368 = vpop.f32.mrf.mxu0
    %v1369 = vadd.f32 %v690, %v1368
    %1370 = vmatmul.bf16.gmra.mxu0 %v1100
    %v1371 = vpop.f32.mrf.mxu0
    %v1372 = vadd.f32 %v690, %v1371
    %v1373 = vpop.f32.mrf.mxu0
    %v1374 = vadd.f32 %v690, %v1373
    %1375 = vmatmul.bf16.gmra.mxu0 %v1104
    %v1376 = vpop.f32.mrf.mxu0
    %v1377 = vadd.f32 %v690, %v1376
    %v1378 = vpop.f32.mrf.mxu0
    %v1379 = vadd.f32 %v690, %v1378
    %1380 = vmatmul.bf16.gmra.mxu0 %v1108
    %v1381 = vpop.f32.mrf.mxu0
    %v1382 = vadd.f32 %v690, %v1381
    %v1383 = vpop.f32.mrf.mxu0
    %v1384 = vadd.f32 %v690, %v1383
    %1385 = vmatmul.bf16.gmra.mxu0 %v1112
    %v1386 = vpop.f32.mrf.mxu0
    %v1387 = vadd.f32 %v690, %v1386
    %v1388 = vpop.f32.mrf.mxu0
    %v1389 = vadd.f32 %v690, %v1388
    %1390 = vmatmul.bf16.gmra.mxu0 %v1116
    %v1391 = vpop.f32.mrf.mxu0
    %v1392 = vadd.f32 %v690, %v1391
    %v1393 = vpop.f32.mrf.mxu0
    %v1394 = vadd.f32 %v690, %v1393
    %1395 = vmatmul.bf16.gmra.mxu0 %v1120
    %v1396 = vpop.f32.mrf.mxu0
    %v1397 = vadd.f32 %v690, %v1396
    %v1398 = vpop.f32.mrf.mxu0
    %v1399 = vadd.f32 %v690, %v1398
    %1400 = vmatmul.bf16.gmra.mxu0 %v1124
    %v1401 = vpop.f32.mrf.mxu0
    %v1402 = vadd.f32 %v690, %v1401
    %v1403 = vpop.f32.mrf.mxu0
    %v1404 = vadd.f32 %v690, %v1403
    %1405 = vmatmul.bf16.gmra.mxu0 %v1128
    %v1406 = vpop.f32.mrf.mxu0
    %v1407 = vadd.f32 %v690, %v1406
    %v1408 = vpop.f32.mrf.mxu0
    %v1409 = vadd.f32 %v690, %v1408
    %1410 = vmatmul.bf16.gmra.mxu0 %v1132
    %v1411 = vpop.f32.mrf.mxu0
    %v1412 = vadd.f32 %v690, %v1411
    %v1413 = vpop.f32.mrf.mxu0
    %v1414 = vadd.f32 %v690, %v1413
    %1415 = vmatmul.bf16.gmra.mxu0 %v1136
    %v1416 = vpop.f32.mrf.mxu0
    %v1417 = vadd.f32 %v690, %v1416
    %v1418 = vpop.f32.mrf.mxu0
    %v1419 = vadd.f32 %v690, %v1418
    %1420 = vmatmul.bf16.gmra.mxu0 %v1140
    %v1421 = vpop.f32.mrf.mxu0
    %v1422 = vadd.f32 %v690, %v1421
    %v1423 = vpop.f32.mrf.mxu0
    %v1424 = vadd.f32 %v690, %v1423
    %1425 = vmatmul.bf16.gmra.mxu0 %v1144
    %v1426 = vpop.f32.mrf.mxu0
    %v1427 = vadd.f32 %v690, %v1426
    %v1428 = vpop.f32.mrf.mxu0
    %v1429 = vadd.f32 %v690, %v1428
    %1430 = vmatmul.bf16.gmra.mxu0 %v1148
    %v1431 = vpop.f32.mrf.mxu0
    %v1432 = vadd.f32 %v690, %v1431
    %v1433 = vpop.f32.mrf.mxu0
    %v1434 = vadd.f32 %v690, %v1433
    %1435 = vmatmul.bf16.gmra.mxu0 %v1152
    %v1436 = vpop.f32.mrf.mxu0
    %v1437 = vadd.f32 %v690, %v1436
    %v1438 = vpop.f32.mrf.mxu0
    %v1439 = vadd.f32 %v690, %v1438
    %1440 = vmatmul.bf16.gmra.mxu0 %v1156
    %v1441 = vpop.f32.mrf.mxu0
    %v1442 = vadd.f32 %v690, %v1441
    %v1443 = vpop.f32.mrf.mxu0
    %v1444 = vadd.f32 %v690, %v1443
    %1445 = vmatmul.bf16.gmra.mxu0 %v1160
    %v1446 = vpop.f32.mrf.mxu0
    %v1447 = vadd.f32 %v690, %v1446
    %v1448 = vpop.f32.mrf.mxu0
    %v1449 = vadd.f32 %v690, %v1448
    %1450 = vmatmul.bf16.gmra.mxu0 %v1164
    %v1451 = vpop.f32.mrf.mxu0
    %v1452 = vadd.f32 %v690, %v1451
    %v1453 = vpop.f32.mrf.mxu0
    %v1454 = vadd.f32 %v690, %v1453
    %1455 = vmatmul.bf16.gmra.mxu0 %v1168
    %v1456 = vpop.f32.mrf.mxu0
    %v1457 = vadd.f32 %v690, %v1456
    %v1458 = vpop.f32.mrf.mxu0
    %v1459 = vadd.f32 %v690, %v1458
    %1460 = vmatmul.bf16.gmra.mxu0 %v1172
    %v1461 = vpop.f32.mrf.mxu0
    %v1462 = vadd.f32 %v690, %v1461
    %v1463 = vpop.f32.mrf.mxu0
    %v1464 = vadd.f32 %v690, %v1463
    %1465 = vmatmul.bf16.gmra.mxu0 %v1176
    %v1466 = vpop.f32.mrf.mxu0
    %v1467 = vadd.f32 %v690, %v1466
    %v1468 = vpop.f32.mrf.mxu0
    %v1469 = vadd.f32 %v690, %v1468
    %1470 = vmatmul.bf16.gmra.mxu0 %v1180
    %v1471 = vpop.f32.mrf.mxu0
    %v1472 = vadd.f32 %v690, %v1471
    %v1473 = vpop.f32.mrf.mxu0
    %v1474 = vadd.f32 %v690, %v1473
    %1475 = vmatmul.bf16.gmra.mxu0 %v1184
    %v1476 = vpop.f32.mrf.mxu0
    %v1477 = vadd.f32 %v690, %v1476
    %v1478 = vpop.f32.mrf.mxu0
    %v1479 = vadd.f32 %v690, %v1478
    %1480 = vmatmul.bf16.gmra.mxu0 %v1188
    %v1481 = vpop.f32.mrf.mxu0
    %v1482 = vadd.f32 %v690, %v1481
    %v1483 = vpop.f32.mrf.mxu0
    %v1484 = vadd.f32 %v690, %v1483
    %1485 = vmatmul.bf16.gmra.mxu0 %v1192
    %v1486 = vpop.f32.mrf.mxu0
    %v1487 = vadd.f32 %v690, %v1486
    %v1488 = vpop.f32.mrf.mxu0
    %v1489 = vadd.f32 %v690, %v1488
    %1490 = vmatmul.bf16.gmra.mxu0 %v1196
    %v1491 = vpop.f32.mrf.mxu0
    %v1492 = vadd.f32 %v690, %v1491
    %v1493 = vpop.f32.mrf.mxu0
    %v1494 = vadd.f32 %v690, %v1493
    %1495 = vmatmul.bf16.gmra.mxu0 %v1200
    %v1496 = vpop.f32.mrf.mxu0
    %v1497 = vadd.f32 %v690, %v1496
    %v1498 = vpop.f32.mrf.mxu0
    %v1499 = vadd.f32 %v690, %v1498
    %1500 = vdwg.mxu0
    %1501 = vmatpush.bf16.msra.mxu0 %v543
    %1502 = vmatpush.bf16.msra.mxu0 %v542
    %1503 = vmatpush.bf16.msra.mxu0 %v541
    %1504 = vmatpush.bf16.msra.mxu0 %v540
    %1505 = vmatpush.bf16.msra.mxu0 %v539
    %1506 = vmatpush.bf16.msra.mxu0 %v538
    %1507 = vmatpush.bf16.msra.mxu0 %v537
    %1508 = vmatpush.bf16.msra.mxu0 %v536
    %1509 = vmatmul.bf16.gmra.mxu0 %v1077
    %v1510 = vpop.f32.mrf.mxu0
    %v1511 = vadd.f32 %v1342, %v1510
    %v1512 = vpop.f32.mrf.mxu0
    %v1513 = vadd.f32 %v1344, %v1512
    %1514 = vmatmul.bf16.gmra.mxu0 %v1081
    %v1515 = vpop.f32.mrf.mxu0
    %v1516 = vadd.f32 %v1347, %v1515
    %v1517 = vpop.f32.mrf.mxu0
    %v1518 = vadd.f32 %v1349, %v1517
    %1519 = vmatmul.bf16.gmra.mxu0 %v1085
    %v1520 = vpop.f32.mrf.mxu0
    %v1521 = vadd.f32 %v1352, %v1520
    %v1522 = vpop.f32.mrf.mxu0
    %v1523 = vadd.f32 %v1354, %v1522
    %1524 = vmatmul.bf16.gmra.mxu0 %v1089
    %v1525 = vpop.f32.mrf.mxu0
    %v1526 = vadd.f32 %v1357, %v1525
    %v1527 = vpop.f32.mrf.mxu0
    %v1528 = vadd.f32 %v1359, %v1527
    %1529 = vmatmul.bf16.gmra.mxu0 %v1093
    %v1530 = vpop.f32.mrf.mxu0
    %v1531 = vadd.f32 %v1362, %v1530
    %v1532 = vpop.f32.mrf.mxu0
    %v1533 = vadd.f32 %v1364, %v1532
    %1534 = vmatmul.bf16.gmra.mxu0 %v1097
    %v1535 = vpop.f32.mrf.mxu0
    %v1536 = vadd.f32 %v1367, %v1535
    %v1537 = vpop.f32.mrf.mxu0
    %v1538 = vadd.f32 %v1369, %v1537
    %1539 = vmatmul.bf16.gmra.mxu0 %v1101
    %v1540 = vpop.f32.mrf.mxu0
    %v1541 = vadd.f32 %v1372, %v1540
    %v1542 = vpop.f32.mrf.mxu0
    %v1543 = vadd.f32 %v1374, %v1542
    %1544 = vmatmul.bf16.gmra.mxu0 %v1105
    %v1545 = vpop.f32.mrf.mxu0
    %v1546 = vadd.f32 %v1377, %v1545
    %v1547 = vpop.f32.mrf.mxu0
    %v1548 = vadd.f32 %v1379, %v1547
    %1549 = vmatmul.bf16.gmra.mxu0 %v1109
    %v1550 = vpop.f32.mrf.mxu0
    %v1551 = vadd.f32 %v1382, %v1550
    %v1552 = vpop.f32.mrf.mxu0
    %v1553 = vadd.f32 %v1384, %v1552
    %1554 = vmatmul.bf16.gmra.mxu0 %v1113
    %v1555 = vpop.f32.mrf.mxu0
    %v1556 = vadd.f32 %v1387, %v1555
    %v1557 = vpop.f32.mrf.mxu0
    %v1558 = vadd.f32 %v1389, %v1557
    %1559 = vmatmul.bf16.gmra.mxu0 %v1117
    %v1560 = vpop.f32.mrf.mxu0
    %v1561 = vadd.f32 %v1392, %v1560
    %v1562 = vpop.f32.mrf.mxu0
    %v1563 = vadd.f32 %v1394, %v1562
    %1564 = vmatmul.bf16.gmra.mxu0 %v1121
    %v1565 = vpop.f32.mrf.mxu0
    %v1566 = vadd.f32 %v1397, %v1565
    %v1567 = vpop.f32.mrf.mxu0
    %v1568 = vadd.f32 %v1399, %v1567
    %1569 = vmatmul.bf16.gmra.mxu0 %v1125
    %v1570 = vpop.f32.mrf.mxu0
    %v1571 = vadd.f32 %v1402, %v1570
    %v1572 = vpop.f32.mrf.mxu0
    %v1573 = vadd.f32 %v1404, %v1572
    %1574 = vmatmul.bf16.gmra.mxu0 %v1129
    %v1575 = vpop.f32.mrf.mxu0
    %v1576 = vadd.f32 %v1407, %v1575
    %v1577 = vpop.f32.mrf.mxu0
    %v1578 = vadd.f32 %v1409, %v1577
    %1579 = vmatmul.bf16.gmra.mxu0 %v1133
    %v1580 = vpop.f32.mrf.mxu0
    %v1581 = vadd.f32 %v1412, %v1580
    %v1582 = vpop.f32.mrf.mxu0
    %v1583 = vadd.f32 %v1414, %v1582
    %1584 = vmatmul.bf16.gmra.mxu0 %v1137
    %v1585 = vpop.f32.mrf.mxu0
    %v1586 = vadd.f32 %v1417, %v1585
    %v1587 = vpop.f32.mrf.mxu0
    %v1588 = vadd.f32 %v1419, %v1587
    %1589 = vmatmul.bf16.gmra.mxu0 %v1141
    %v1590 = vpop.f32.mrf.mxu0
    %v1591 = vadd.f32 %v1422, %v1590
    %v1592 = vpop.f32.mrf.mxu0
    %v1593 = vadd.f32 %v1424, %v1592
    %1594 = vmatmul.bf16.gmra.mxu0 %v1145
    %v1595 = vpop.f32.mrf.mxu0
    %v1596 = vadd.f32 %v1427, %v1595
    %v1597 = vpop.f32.mrf.mxu0
    %v1598 = vadd.f32 %v1429, %v1597
    %1599 = vmatmul.bf16.gmra.mxu0 %v1149
    %v1600 = vpop.f32.mrf.mxu0
    %v1601 = vadd.f32 %v1432, %v1600
    %v1602 = vpop.f32.mrf.mxu0
    %v1603 = vadd.f32 %v1434, %v1602
    %1604 = vmatmul.bf16.gmra.mxu0 %v1153
    %v1605 = vpop.f32.mrf.mxu0
    %v1606 = vadd.f32 %v1437, %v1605
    %v1607 = vpop.f32.mrf.mxu0
    %v1608 = vadd.f32 %v1439, %v1607
    %1609 = vmatmul.bf16.gmra.mxu0 %v1157
    %v1610 = vpop.f32.mrf.mxu0
    %v1611 = vadd.f32 %v1442, %v1610
    %v1612 = vpop.f32.mrf.mxu0
    %v1613 = vadd.f32 %v1444, %v1612
    %1614 = vmatmul.bf16.gmra.mxu0 %v1161
    %v1615 = vpop.f32.mrf.mxu0
    %v1616 = vadd.f32 %v1447, %v1615
    %v1617 = vpop.f32.mrf.mxu0
    %v1618 = vadd.f32 %v1449, %v1617
    %1619 = vmatmul.bf16.gmra.mxu0 %v1165
    %v1620 = vpop.f32.mrf.mxu0
    %v1621 = vadd.f32 %v1452, %v1620
    %v1622 = vpop.f32.mrf.mxu0
    %v1623 = vadd.f32 %v1454, %v1622
    %1624 = vmatmul.bf16.gmra.mxu0 %v1169
    %v1625 = vpop.f32.mrf.mxu0
    %v1626 = vadd.f32 %v1457, %v1625
    %v1627 = vpop.f32.mrf.mxu0
    %v1628 = vadd.f32 %v1459, %v1627
    %1629 = vmatmul.bf16.gmra.mxu0 %v1173
    %v1630 = vpop.f32.mrf.mxu0
    %v1631 = vadd.f32 %v1462, %v1630
    %v1632 = vpop.f32.mrf.mxu0
    %v1633 = vadd.f32 %v1464, %v1632
    %1634 = vmatmul.bf16.gmra.mxu0 %v1177
    %v1635 = vpop.f32.mrf.mxu0
    %v1636 = vadd.f32 %v1467, %v1635
    %v1637 = vpop.f32.mrf.mxu0
    %v1638 = vadd.f32 %v1469, %v1637
    %1639 = vmatmul.bf16.gmra.mxu0 %v1181
    %v1640 = vpop.f32.mrf.mxu0
    %v1641 = vadd.f32 %v1472, %v1640
    %v1642 = vpop.f32.mrf.mxu0
    %v1643 = vadd.f32 %v1474, %v1642
    %1644 = vmatmul.bf16.gmra.mxu0 %v1185
    %v1645 = vpop.f32.mrf.mxu0
    %v1646 = vadd.f32 %v1477, %v1645
    %v1647 = vpop.f32.mrf.mxu0
    %v1648 = vadd.f32 %v1479, %v1647
    %1649 = vmatmul.bf16.gmra.mxu0 %v1189
    %v1650 = vpop.f32.mrf.mxu0
    %v1651 = vadd.f32 %v1482, %v1650
    %v1652 = vpop.f32.mrf.mxu0
    %v1653 = vadd.f32 %v1484, %v1652
    %1654 = vmatmul.bf16.gmra.mxu0 %v1193
    %v1655 = vpop.f32.mrf.mxu0
    %v1656 = vadd.f32 %v1487, %v1655
    %v1657 = vpop.f32.mrf.mxu0
    %v1658 = vadd.f32 %v1489, %v1657
    %1659 = vmatmul.bf16.gmra.mxu0 %v1197
    %v1660 = vpop.f32.mrf.mxu0
    %v1661 = vadd.f32 %v1492, %v1660
    %v1662 = vpop.f32.mrf.mxu0
    %v1663 = vadd.f32 %v1494, %v1662
    %1664 = vmatmul.bf16.gmra.mxu0 %v1201
    %v1665 = vpop.f32.mrf.mxu0
    %v1666 = vadd.f32 %v1497, %v1665
    %v1667 = vpop.f32.mrf.mxu0
    %v1668 = vadd.f32 %v1499, %v1667
    %1669 = vdwg.mxu0
    %1670 = vmatpush.bf16.msra.mxu0 %v551
    %1671 = vmatpush.bf16.msra.mxu0 %v550
    %1672 = vmatpush.bf16.msra.mxu0 %v549
    %1673 = vmatpush.bf16.msra.mxu0 %v548
    %1674 = vmatpush.bf16.msra.mxu0 %v547
    %1675 = vmatpush.bf16.msra.mxu0 %v546
    %1676 = vmatpush.bf16.msra.mxu0 %v545
    %1677 = vmatpush.bf16.msra.mxu0 %v544
    %1678 = vmatmul.bf16.gmra.mxu0 %v1078
    %v1679 = vpop.f32.mrf.mxu0
    %v1680 = vadd.f32 %v1511, %v1679
    %v1681 = vpop.f32.mrf.mxu0
    %v1682 = vadd.f32 %v1513, %v1681
    %1683 = vmatmul.bf16.gmra.mxu0 %v1082
    %v1684 = vpop.f32.mrf.mxu0
    %v1685 = vadd.f32 %v1516, %v1684
    %v1686 = vpop.f32.mrf.mxu0
    %v1687 = vadd.f32 %v1518, %v1686
    %1688 = vmatmul.bf16.gmra.mxu0 %v1086
    %v1689 = vpop.f32.mrf.mxu0
    %v1690 = vadd.f32 %v1521, %v1689
    %v1691 = vpop.f32.mrf.mxu0
    %v1692 = vadd.f32 %v1523, %v1691
    %1693 = vmatmul.bf16.gmra.mxu0 %v1090
    %v1694 = vpop.f32.mrf.mxu0
    %v1695 = vadd.f32 %v1526, %v1694
    %v1696 = vpop.f32.mrf.mxu0
    %v1697 = vadd.f32 %v1528, %v1696
    %1698 = vmatmul.bf16.gmra.mxu0 %v1094
    %v1699 = vpop.f32.mrf.mxu0
    %v1700 = vadd.f32 %v1531, %v1699
    %v1701 = vpop.f32.mrf.mxu0
    %v1702 = vadd.f32 %v1533, %v1701
    %1703 = vmatmul.bf16.gmra.mxu0 %v1098
    %v1704 = vpop.f32.mrf.mxu0
    %v1705 = vadd.f32 %v1536, %v1704
    %v1706 = vpop.f32.mrf.mxu0
    %v1707 = vadd.f32 %v1538, %v1706
    %1708 = vmatmul.bf16.gmra.mxu0 %v1102
    %v1709 = vpop.f32.mrf.mxu0
    %v1710 = vadd.f32 %v1541, %v1709
    %v1711 = vpop.f32.mrf.mxu0
    %v1712 = vadd.f32 %v1543, %v1711
    %1713 = vmatmul.bf16.gmra.mxu0 %v1106
    %v1714 = vpop.f32.mrf.mxu0
    %v1715 = vadd.f32 %v1546, %v1714
    %v1716 = vpop.f32.mrf.mxu0
    %v1717 = vadd.f32 %v1548, %v1716
    %1718 = vmatmul.bf16.gmra.mxu0 %v1110
    %v1719 = vpop.f32.mrf.mxu0
    %v1720 = vadd.f32 %v1551, %v1719
    %v1721 = vpop.f32.mrf.mxu0
    %v1722 = vadd.f32 %v1553, %v1721
    %1723 = vmatmul.bf16.gmra.mxu0 %v1114
    %v1724 = vpop.f32.mrf.mxu0
    %v1725 = vadd.f32 %v1556, %v1724
    %v1726 = vpop.f32.mrf.mxu0
    %v1727 = vadd.f32 %v1558, %v1726
    %1728 = vmatmul.bf16.gmra.mxu0 %v1118
    %v1729 = vpop.f32.mrf.mxu0
    %v1730 = vadd.f32 %v1561, %v1729
    %v1731 = vpop.f32.mrf.mxu0
    %v1732 = vadd.f32 %v1563, %v1731
    %1733 = vmatmul.bf16.gmra.mxu0 %v1122
    %v1734 = vpop.f32.mrf.mxu0
    %v1735 = vadd.f32 %v1566, %v1734
    %v1736 = vpop.f32.mrf.mxu0
    %v1737 = vadd.f32 %v1568, %v1736
    %1738 = vmatmul.bf16.gmra.mxu0 %v1126
    %v1739 = vpop.f32.mrf.mxu0
    %v1740 = vadd.f32 %v1571, %v1739
    %v1741 = vpop.f32.mrf.mxu0
    %v1742 = vadd.f32 %v1573, %v1741
    %1743 = vmatmul.bf16.gmra.mxu0 %v1130
    %v1744 = vpop.f32.mrf.mxu0
    %v1745 = vadd.f32 %v1576, %v1744
    %v1746 = vpop.f32.mrf.mxu0
    %v1747 = vadd.f32 %v1578, %v1746
    %1748 = vmatmul.bf16.gmra.mxu0 %v1134
    %v1749 = vpop.f32.mrf.mxu0
    %v1750 = vadd.f32 %v1581, %v1749
    %v1751 = vpop.f32.mrf.mxu0
    %v1752 = vadd.f32 %v1583, %v1751
    %1753 = vmatmul.bf16.gmra.mxu0 %v1138
    %v1754 = vpop.f32.mrf.mxu0
    %v1755 = vadd.f32 %v1586, %v1754
    %v1756 = vpop.f32.mrf.mxu0
    %v1757 = vadd.f32 %v1588, %v1756
    %1758 = vmatmul.bf16.gmra.mxu0 %v1142
    %v1759 = vpop.f32.mrf.mxu0
    %v1760 = vadd.f32 %v1591, %v1759
    %v1761 = vpop.f32.mrf.mxu0
    %v1762 = vadd.f32 %v1593, %v1761
    %1763 = vmatmul.bf16.gmra.mxu0 %v1146
    %v1764 = vpop.f32.mrf.mxu0
    %v1765 = vadd.f32 %v1596, %v1764
    %v1766 = vpop.f32.mrf.mxu0
    %v1767 = vadd.f32 %v1598, %v1766
    %1768 = vmatmul.bf16.gmra.mxu0 %v1150
    %v1769 = vpop.f32.mrf.mxu0
    %v1770 = vadd.f32 %v1601, %v1769
    %v1771 = vpop.f32.mrf.mxu0
    %v1772 = vadd.f32 %v1603, %v1771
    %1773 = vmatmul.bf16.gmra.mxu0 %v1154
    %v1774 = vpop.f32.mrf.mxu0
    %v1775 = vadd.f32 %v1606, %v1774
    %v1776 = vpop.f32.mrf.mxu0
    %v1777 = vadd.f32 %v1608, %v1776
    %1778 = vmatmul.bf16.gmra.mxu0 %v1158
    %v1779 = vpop.f32.mrf.mxu0
    %v1780 = vadd.f32 %v1611, %v1779
    %v1781 = vpop.f32.mrf.mxu0
    %v1782 = vadd.f32 %v1613, %v1781
    %1783 = vmatmul.bf16.gmra.mxu0 %v1162
    %v1784 = vpop.f32.mrf.mxu0
    %v1785 = vadd.f32 %v1616, %v1784
    %v1786 = vpop.f32.mrf.mxu0
    %v1787 = vadd.f32 %v1618, %v1786
    %1788 = vmatmul.bf16.gmra.mxu0 %v1166
    %v1789 = vpop.f32.mrf.mxu0
    %v1790 = vadd.f32 %v1621, %v1789
    %v1791 = vpop.f32.mrf.mxu0
    %v1792 = vadd.f32 %v1623, %v1791
    %1793 = vmatmul.bf16.gmra.mxu0 %v1170
    %v1794 = vpop.f32.mrf.mxu0
    %v1795 = vadd.f32 %v1626, %v1794
    %v1796 = vpop.f32.mrf.mxu0
    %v1797 = vadd.f32 %v1628, %v1796
    %1798 = vmatmul.bf16.gmra.mxu0 %v1174
    %v1799 = vpop.f32.mrf.mxu0
    %v1800 = vadd.f32 %v1631, %v1799
    %v1801 = vpop.f32.mrf.mxu0
    %v1802 = vadd.f32 %v1633, %v1801
    %1803 = vmatmul.bf16.gmra.mxu0 %v1178
    %v1804 = vpop.f32.mrf.mxu0
    %v1805 = vadd.f32 %v1636, %v1804
    %v1806 = vpop.f32.mrf.mxu0
    %v1807 = vadd.f32 %v1638, %v1806
    %1808 = vmatmul.bf16.gmra.mxu0 %v1182
    %v1809 = vpop.f32.mrf.mxu0
    %v1810 = vadd.f32 %v1641, %v1809
    %v1811 = vpop.f32.mrf.mxu0
    %v1812 = vadd.f32 %v1643, %v1811
    %1813 = vmatmul.bf16.gmra.mxu0 %v1186
    %v1814 = vpop.f32.mrf.mxu0
    %v1815 = vadd.f32 %v1646, %v1814
    %v1816 = vpop.f32.mrf.mxu0
    %v1817 = vadd.f32 %v1648, %v1816
    %1818 = vmatmul.bf16.gmra.mxu0 %v1190
    %v1819 = vpop.f32.mrf.mxu0
    %v1820 = vadd.f32 %v1651, %v1819
    %v1821 = vpop.f32.mrf.mxu0
    %v1822 = vadd.f32 %v1653, %v1821
    %1823 = vmatmul.bf16.gmra.mxu0 %v1194
    %v1824 = vpop.f32.mrf.mxu0
    %v1825 = vadd.f32 %v1656, %v1824
    %v1826 = vpop.f32.mrf.mxu0
    %v1827 = vadd.f32 %v1658, %v1826
    %1828 = vmatmul.bf16.gmra.mxu0 %v1198
    %v1829 = vpop.f32.mrf.mxu0
    %v1830 = vadd.f32 %v1661, %v1829
    %v1831 = vpop.f32.mrf.mxu0
    %v1832 = vadd.f32 %v1663, %v1831
    %1833 = vmatmul.bf16.gmra.mxu0 %v1202
    %v1834 = vpop.f32.mrf.mxu0
    %v1835 = vadd.f32 %v1666, %v1834
    %v1836 = vpop.f32.mrf.mxu0
    %v1837 = vadd.f32 %v1668, %v1836
    %1838 = vdwg.mxu0
    %1839 = vmatpush.bf16.msra.mxu0 %v559
    %1840 = vmatpush.bf16.msra.mxu0 %v558
    %1841 = vmatpush.bf16.msra.mxu0 %v557
    %1842 = vmatpush.bf16.msra.mxu0 %v556
    %1843 = vmatpush.bf16.msra.mxu0 %v555
    %1844 = vmatpush.bf16.msra.mxu0 %v554
    %1845 = vmatpush.bf16.msra.mxu0 %v553
    %1846 = vmatpush.bf16.msra.mxu0 %v552
    %1847 = vmatmul.bf16.gmra.mxu0 %v1079
    %v1848 = vpop.f32.mrf.mxu0
    %v1849 = vadd.f32 %v1680, %v1848
    %v1850 = vpop.f32.mrf.mxu0
    %v1851 = vadd.f32 %v1682, %v1850
    %1852 = vmatmul.bf16.gmra.mxu0 %v1083
    %v1853 = vpop.f32.mrf.mxu0
    %v1854 = vadd.f32 %v1685, %v1853
    %v1855 = vpop.f32.mrf.mxu0
    %v1856 = vadd.f32 %v1687, %v1855
    %1857 = vmatmul.bf16.gmra.mxu0 %v1087
    %v1858 = vpop.f32.mrf.mxu0
    %v1859 = vadd.f32 %v1690, %v1858
    %v1860 = vpop.f32.mrf.mxu0
    %v1861 = vadd.f32 %v1692, %v1860
    %1862 = vmatmul.bf16.gmra.mxu0 %v1091
    %v1863 = vpop.f32.mrf.mxu0
    %v1864 = vadd.f32 %v1695, %v1863
    %v1865 = vpop.f32.mrf.mxu0
    %v1866 = vadd.f32 %v1697, %v1865
    %1867 = vmatmul.bf16.gmra.mxu0 %v1095
    %v1868 = vpop.f32.mrf.mxu0
    %v1869 = vadd.f32 %v1700, %v1868
    %v1870 = vpop.f32.mrf.mxu0
    %v1871 = vadd.f32 %v1702, %v1870
    %1872 = vmatmul.bf16.gmra.mxu0 %v1099
    %v1873 = vpop.f32.mrf.mxu0
    %v1874 = vadd.f32 %v1705, %v1873
    %v1875 = vpop.f32.mrf.mxu0
    %v1876 = vadd.f32 %v1707, %v1875
    %1877 = vmatmul.bf16.gmra.mxu0 %v1103
    %v1878 = vpop.f32.mrf.mxu0
    %v1879 = vadd.f32 %v1710, %v1878
    %v1880 = vpop.f32.mrf.mxu0
    %v1881 = vadd.f32 %v1712, %v1880
    %1882 = vmatmul.bf16.gmra.mxu0 %v1107
    %v1883 = vpop.f32.mrf.mxu0
    %v1884 = vadd.f32 %v1715, %v1883
    %v1885 = vpop.f32.mrf.mxu0
    %v1886 = vadd.f32 %v1717, %v1885
    %1887 = vmatmul.bf16.gmra.mxu0 %v1111
    %v1888 = vpop.f32.mrf.mxu0
    %v1889 = vadd.f32 %v1720, %v1888
    %v1890 = vpop.f32.mrf.mxu0
    %v1891 = vadd.f32 %v1722, %v1890
    %1892 = vmatmul.bf16.gmra.mxu0 %v1115
    %v1893 = vpop.f32.mrf.mxu0
    %v1894 = vadd.f32 %v1725, %v1893
    %v1895 = vpop.f32.mrf.mxu0
    %v1896 = vadd.f32 %v1727, %v1895
    %1897 = vmatmul.bf16.gmra.mxu0 %v1119
    %v1898 = vpop.f32.mrf.mxu0
    %v1899 = vadd.f32 %v1730, %v1898
    %v1900 = vpop.f32.mrf.mxu0
    %v1901 = vadd.f32 %v1732, %v1900
    %1902 = vmatmul.bf16.gmra.mxu0 %v1123
    %v1903 = vpop.f32.mrf.mxu0
    %v1904 = vadd.f32 %v1735, %v1903
    %v1905 = vpop.f32.mrf.mxu0
    %v1906 = vadd.f32 %v1737, %v1905
    %1907 = vmatmul.bf16.gmra.mxu0 %v1127
    %v1908 = vpop.f32.mrf.mxu0
    %v1909 = vadd.f32 %v1740, %v1908
    %v1910 = vpop.f32.mrf.mxu0
    %v1911 = vadd.f32 %v1742, %v1910
    %1912 = vmatmul.bf16.gmra.mxu0 %v1131
    %v1913 = vpop.f32.mrf.mxu0
    %v1914 = vadd.f32 %v1745, %v1913
    %v1915 = vpop.f32.mrf.mxu0
    %v1916 = vadd.f32 %v1747, %v1915
    %1917 = vmatmul.bf16.gmra.mxu0 %v1135
    %v1918 = vpop.f32.mrf.mxu0
    %v1919 = vadd.f32 %v1750, %v1918
    %v1920 = vpop.f32.mrf.mxu0
    %v1921 = vadd.f32 %v1752, %v1920
    %1922 = vmatmul.bf16.gmra.mxu0 %v1139
    %v1923 = vpop.f32.mrf.mxu0
    %v1924 = vadd.f32 %v1755, %v1923
    %v1925 = vpop.f32.mrf.mxu0
    %v1926 = vadd.f32 %v1757, %v1925
    %1927 = vmatmul.bf16.gmra.mxu0 %v1143
    %v1928 = vpop.f32.mrf.mxu0
    %v1929 = vadd.f32 %v1760, %v1928
    %v1930 = vpop.f32.mrf.mxu0
    %v1931 = vadd.f32 %v1762, %v1930
    %1932 = vmatmul.bf16.gmra.mxu0 %v1147
    %v1933 = vpop.f32.mrf.mxu0
    %v1934 = vadd.f32 %v1765, %v1933
    %v1935 = vpop.f32.mrf.mxu0
    %v1936 = vadd.f32 %v1767, %v1935
    %1937 = vmatmul.bf16.gmra.mxu0 %v1151
    %v1938 = vpop.f32.mrf.mxu0
    %v1939 = vadd.f32 %v1770, %v1938
    %v1940 = vpop.f32.mrf.mxu0
    %v1941 = vadd.f32 %v1772, %v1940
    %1942 = vmatmul.bf16.gmra.mxu0 %v1155
    %v1943 = vpop.f32.mrf.mxu0
    %v1944 = vadd.f32 %v1775, %v1943
    %v1945 = vpop.f32.mrf.mxu0
    %v1946 = vadd.f32 %v1777, %v1945
    %1947 = vmatmul.bf16.gmra.mxu0 %v1159
    %v1948 = vpop.f32.mrf.mxu0
    %v1949 = vadd.f32 %v1780, %v1948
    %v1950 = vpop.f32.mrf.mxu0
    %v1951 = vadd.f32 %v1782, %v1950
    %1952 = vmatmul.bf16.gmra.mxu0 %v1163
    %v1953 = vpop.f32.mrf.mxu0
    %v1954 = vadd.f32 %v1785, %v1953
    %v1955 = vpop.f32.mrf.mxu0
    %v1956 = vadd.f32 %v1787, %v1955
    %1957 = vmatmul.bf16.gmra.mxu0 %v1167
    %v1958 = vpop.f32.mrf.mxu0
    %v1959 = vadd.f32 %v1790, %v1958
    %v1960 = vpop.f32.mrf.mxu0
    %v1961 = vadd.f32 %v1792, %v1960
    %1962 = vmatmul.bf16.gmra.mxu0 %v1171
    %v1963 = vpop.f32.mrf.mxu0
    %v1964 = vadd.f32 %v1795, %v1963
    %v1965 = vpop.f32.mrf.mxu0
    %v1966 = vadd.f32 %v1797, %v1965
    %1967 = vmatmul.bf16.gmra.mxu0 %v1175
    %v1968 = vpop.f32.mrf.mxu0
    %v1969 = vadd.f32 %v1800, %v1968
    %v1970 = vpop.f32.mrf.mxu0
    %v1971 = vadd.f32 %v1802, %v1970
    %1972 = vmatmul.bf16.gmra.mxu0 %v1179
    %v1973 = vpop.f32.mrf.mxu0
    %v1974 = vadd.f32 %v1805, %v1973
    %v1975 = vpop.f32.mrf.mxu0
    %v1976 = vadd.f32 %v1807, %v1975
    %1977 = vmatmul.bf16.gmra.mxu0 %v1183
    %v1978 = vpop.f32.mrf.mxu0
    %v1979 = vadd.f32 %v1810, %v1978
    %v1980 = vpop.f32.mrf.mxu0
    %v1981 = vadd.f32 %v1812, %v1980
    %1982 = vmatmul.bf16.gmra.mxu0 %v1187
    %v1983 = vpop.f32.mrf.mxu0
    %v1984 = vadd.f32 %v1815, %v1983
    %v1985 = vpop.f32.mrf.mxu0
    %v1986 = vadd.f32 %v1817, %v1985
    %1987 = vmatmul.bf16.gmra.mxu0 %v1191
    %v1988 = vpop.f32.mrf.mxu0
    %v1989 = vadd.f32 %v1820, %v1988
    %v1990 = vpop.f32.mrf.mxu0
    %v1991 = vadd.f32 %v1822, %v1990
    %1992 = vmatmul.bf16.gmra.mxu0 %v1195
    %v1993 = vpop.f32.mrf.mxu0
    %v1994 = vadd.f32 %v1825, %v1993
    %v1995 = vpop.f32.mrf.mxu0
    %v1996 = vadd.f32 %v1827, %v1995
    %1997 = vmatmul.bf16.gmra.mxu0 %v1199
    %v1998 = vpop.f32.mrf.mxu0
    %v1999 = vadd.f32 %v1830, %v1998
    %v2000 = vpop.f32.mrf.mxu0
    %v2001 = vadd.f32 %v1832, %v2000
    %2002 = vmatmul.bf16.gmra.mxu0 %v1203
    %v2003 = vpop.f32.mrf.mxu0
    %v2004 = vadd.f32 %v1835, %v2003
    %v2005 = vpop.f32.mrf.mxu0
    %v2006 = vadd.f32 %v1837, %v2005
    %2007 = vdwg.mxu0
    %v2008 = vmax.f32 %v1849, 0.0
    %v2009 = vmax.f32 %v1851, 0.0
    %v2010 = vmax.f32 %v1854, 0.0
    %v2011 = vmax.f32 %v1856, 0.0
    %v2012 = vmax.f32 %v1859, 0.0
    %v2013 = vmax.f32 %v1861, 0.0
    %v2014 = vmax.f32 %v1864, 0.0
    %v2015 = vmax.f32 %v1866, 0.0
    %v2016 = vmax.f32 %v1869, 0.0
    %v2017 = vmax.f32 %v1871, 0.0
    %v2018 = vmax.f32 %v1874, 0.0
    %v2019 = vmax.f32 %v1876, 0.0
    %v2020 = vmax.f32 %v1879, 0.0
    %v2021 = vmax.f32 %v1881, 0.0
    %v2022 = vmax.f32 %v1884, 0.0
    %v2023 = vmax.f32 %v1886, 0.0
    %v2024 = vmax.f32 %v1889, 0.0
    %v2025 = vmax.f32 %v1891, 0.0
    %v2026 = vmax.f32 %v1894, 0.0
    %v2027 = vmax.f32 %v1896, 0.0
    %v2028 = vmax.f32 %v1899, 0.0
    %v2029 = vmax.f32 %v1901, 0.0
    %v2030 = vmax.f32 %v1904, 0.0
    %v2031 = vmax.f32 %v1906, 0.0
    %v2032 = vmax.f32 %v1909, 0.0
    %v2033 = vmax.f32 %v1911, 0.0
    %v2034 = vmax.f32 %v1914, 0.0
    %v2035 = vmax.f32 %v1916, 0.0
    %v2036 = vmax.f32 %v1919, 0.0
    %v2037 = vmax.f32 %v1921, 0.0
    %v2038 = vmax.f32 %v1924, 0.0
    %v2039 = vmax.f32 %v1926, 0.0
    %v2040 = vmax.f32 %v1929, 0.0
    %v2041 = vmax.f32 %v1931, 0.0
    %v2042 = vmax.f32 %v1934, 0.0
    %v2043 = vmax.f32 %v1936, 0.0
    %v2044 = vmax.f32 %v1939, 0.0
    %v2045 = vmax.f32 %v1941, 0.0
    %v2046 = vmax.f32 %v1944, 0.0
    %v2047 = vmax.f32 %v1946, 0.0
    %v2048 = vmax.f32 %v1949, 0.0
    %v2049 = vmax.f32 %v1951, 0.0
    %v2050 = vmax.f32 %v1954, 0.0
    %v2051 = vmax.f32 %v1956, 0.0
    %v2052 = vmax.f32 %v1959, 0.0
    %v2053 = vmax.f32 %v1961, 0.0
    %v2054 = vmax.f32 %v1964, 0.0
    %v2055 = vmax.f32 %v1966, 0.0
    %v2056 = vmax.f32 %v1969, 0.0
    %v2057 = vmax.f32 %v1971, 0.0
    %v2058 = vmax.f32 %v1974, 0.0
    %v2059 = vmax.f32 %v1976, 0.0
    %v2060 = vmax.f32 %v1979, 0.0
    %v2061 = vmax.f32 %v1981, 0.0
    %v2062 = vmax.f32 %v1984, 0.0
    %v2063 = vmax.f32 %v1986, 0.0
    %v2064 = vmax.f32 %v1989, 0.0
    %v2065 = vmax.f32 %v1991, 0.0
    %v2066 = vmax.f32 %v1994, 0.0
    %v2067 = vmax.f32 %v1996, 0.0
    %v2068 = vmax.f32 %v1999, 0.0
    %v2069 = vmax.f32 %v2001, 0.0
    %v2070 = vmax.f32 %v2004, 0.0
    %v2071 = vmax.f32 %v2006, 0.0
    %v2072 = vpack.c.bf16 %v2009, %v2008
    %v2073 = vpack.c.bf16 %v2011, %v2010
    %v2074 = vpack.c.bf16 %v2013, %v2012
    %v2075 = vpack.c.bf16 %v2015, %v2014
    %v2076 = vpack.c.bf16 %v2017, %v2016
    %v2077 = vpack.c.bf16 %v2019, %v2018
    %v2078 = vpack.c.bf16 %v2021, %v2020
    %v2079 = vpack.c.bf16 %v2023, %v2022
    %v2080 = vpack.c.bf16 %v2025, %v2024
    %v2081 = vpack.c.bf16 %v2027, %v2026
    %v2082 = vpack.c.bf16 %v2029, %v2028
    %v2083 = vpack.c.bf16 %v2031, %v2030
    %v2084 = vpack.c.bf16 %v2033, %v2032
    %v2085 = vpack.c.bf16 %v2035, %v2034
    %v2086 = vpack.c.bf16 %v2037, %v2036
    %v2087 = vpack.c.bf16 %v2039, %v2038
    %v2088 = vpack.c.bf16 %v2041, %v2040
    %v2089 = vpack.c.bf16 %v2043, %v2042
    %v2090 = vpack.c.bf16 %v2045, %v2044
    %v2091 = vpack.c.bf16 %v2047, %v2046
    %v2092 = vpack.c.bf16 %v2049, %v2048
    %v2093 = vpack.c.bf16 %v2051, %v2050
    %v2094 = vpack.c.bf16 %v2053, %v2052
    %v2095 = vpack.c.bf16 %v2055, %v2054
    %v2096 = vpack.c.bf16 %v2057, %v2056
    %v2097 = vpack.c.bf16 %v2059, %v2058
    %v2098 = vpack.c.bf16 %v2061, %v2060
    %v2099 = vpack.c.bf16 %v2063, %v2062
    %v2100 = vpack.c.bf16 %v2065, %v2064
    %v2101 = vpack.c.bf16 %v2067, %v2066
    %v2102 = vpack.c.bf16 %v2069, %v2068
    %v2103 = vpack.c.bf16 %v2071, %v2070
    %v2104 = vld [vmem:[%s4] sm:$0xf]
    %v2105 = vld [vmem:[%s4 + $0x4] sm:$0xf]
    %v2106 = vld [vmem:[%s4 + $0x8] sm:$0xf]
    %v2107 = vld [vmem:[%s4 + $0xc] sm:$0xf]
    %v2108 = vld [vmem:[%s4 + $0x10] sm:$0xf]
    %v2109 = vld [vmem:[%s4 + $0x14] sm:$0xf]
    %v2110 = vld [vmem:[%s4 + $0x18] sm:$0xf]
    %v2111 = vld [vmem:[%s4 + $0x1c] sm:$0xf]
    %v2112 = vld [vmem:[%s4 + $0x20] sm:$0xf]
    %v2113 = vld [vmem:[%s4 + $0x24] sm:$0xf]
    %v2114 = vld [vmem:[%s4 + $0x28] sm:$0xf]
    %v2115 = vld [vmem:[%s4 + $0x2c] sm:$0xf]
    %v2116 = vld [vmem:[%s4 + $0x30] sm:$0xf]
    %v2117 = vld [vmem:[%s4 + $0x34] sm:$0xf]
    %v2118 = vld [vmem:[%s4 + $0x38] sm:$0xf]
    %v2119 = vld [vmem:[%s4 + $0x3c] sm:$0xf]
    %v2136 = vunpack.c.l.b16 %v2104
    %v2137 = vunpack.c.l.b16 %v2105
    %v2138 = vunpack.c.l.b16 %v2106
    %v2139 = vunpack.c.l.b16 %v2107
    %v2140 = vunpack.c.l.b16 %v2108
    %v2141 = vunpack.c.l.b16 %v2109
    %v2142 = vunpack.c.l.b16 %v2110
    %v2143 = vunpack.c.l.b16 %v2111
    %v2144 = vunpack.c.l.b16 %v2112
    %v2145 = vunpack.c.l.b16 %v2113
    %v2146 = vunpack.c.l.b16 %v2114
    %v2147 = vunpack.c.l.b16 %v2115
    %v2148 = vunpack.c.l.b16 %v2116
    %v2149 = vunpack.c.l.b16 %v2117
    %v2150 = vunpack.c.l.b16 %v2118
    %v2151 = vunpack.c.l.b16 %v2119
    %v2152 = vpack.c.b16 %v2137, %v2136
    %v2153 = vpack.c.b16 %v2139, %v2138
    %v2154 = vpack.c.b16 %v2141, %v2140
    %v2155 = vpack.c.b16 %v2143, %v2142
    %v2156 = vpack.c.b16 %v2145, %v2144
    %v2157 = vpack.c.b16 %v2147, %v2146
    %v2158 = vpack.c.b16 %v2149, %v2148
    %v2159 = vpack.c.b16 %v2151, %v2150
    %2168 = vmatpush.bf16.msra.mxu0 %v2159
    %2169 = vmatpush.bf16.msra.mxu0 %v2158
    %2170 = vmatpush.bf16.msra.mxu0 %v2157
    %2171 = vmatpush.bf16.msra.mxu0 %v2156
    %2172 = vmatpush.bf16.msra.mxu0 %v2155
    %2173 = vmatpush.bf16.msra.mxu0 %v2154
    %2174 = vmatpush.bf16.msra.mxu0 %v2153
    %2175 = vmatpush.bf16.msra.mxu0 %v2152
    %2176 = vmatmul.bf16.gmra.mxu0 %v2072
    %v2177 = vpop.f32.mrf.mxu0
    %v2178 = vadd.f32 0.0, %v2177
    %v2179 = vpop.f32.mrf.mxu0
    %v2180 = vadd.f32 0.0, %v2179
    %2181 = vmatmul.bf16.gmra.mxu0 %v2073
    %v2182 = vpop.f32.mrf.mxu0
    %v2183 = vadd.f32 0.0, %v2182
    %v2184 = vpop.f32.mrf.mxu0
    %v2185 = vadd.f32 0.0, %v2184
    %2186 = vmatmul.bf16.gmra.mxu0 %v2074
    %v2187 = vpop.f32.mrf.mxu0
    %v2188 = vadd.f32 0.0, %v2187
    %v2189 = vpop.f32.mrf.mxu0
    %v2190 = vadd.f32 0.0, %v2189
    %2191 = vmatmul.bf16.gmra.mxu0 %v2075
    %v2192 = vpop.f32.mrf.mxu0
    %v2193 = vadd.f32 0.0, %v2192
    %v2194 = vpop.f32.mrf.mxu0
    %v2195 = vadd.f32 0.0, %v2194
    %2196 = vmatmul.bf16.gmra.mxu0 %v2076
    %v2197 = vpop.f32.mrf.mxu0
    %v2198 = vadd.f32 0.0, %v2197
    %v2199 = vpop.f32.mrf.mxu0
    %v2200 = vadd.f32 0.0, %v2199
    %2201 = vmatmul.bf16.gmra.mxu0 %v2077
    %v2202 = vpop.f32.mrf.mxu0
    %v2203 = vadd.f32 0.0, %v2202
    %v2204 = vpop.f32.mrf.mxu0
    %v2205 = vadd.f32 0.0, %v2204
    %2206 = vmatmul.bf16.gmra.mxu0 %v2078
    %v2207 = vpop.f32.mrf.mxu0
    %v2208 = vadd.f32 0.0, %v2207
    %v2209 = vpop.f32.mrf.mxu0
    %v2210 = vadd.f32 0.0, %v2209
    %2211 = vmatmul.bf16.gmra.mxu0 %v2079
    %v2212 = vpop.f32.mrf.mxu0
    %v2213 = vadd.f32 0.0, %v2212
    %v2214 = vpop.f32.mrf.mxu0
    %v2215 = vadd.f32 0.0, %v2214
    %2216 = vmatmul.bf16.gmra.mxu0 %v2080
    %v2217 = vpop.f32.mrf.mxu0
    %v2218 = vadd.f32 0.0, %v2217
    %v2219 = vpop.f32.mrf.mxu0
    %v2220 = vadd.f32 0.0, %v2219
    %2221 = vmatmul.bf16.gmra.mxu0 %v2081
    %v2222 = vpop.f32.mrf.mxu0
    %v2223 = vadd.f32 0.0, %v2222
    %v2224 = vpop.f32.mrf.mxu0
    %v2225 = vadd.f32 0.0, %v2224
    %2226 = vmatmul.bf16.gmra.mxu0 %v2082
    %v2227 = vpop.f32.mrf.mxu0
    %v2228 = vadd.f32 0.0, %v2227
    %v2229 = vpop.f32.mrf.mxu0
    %v2230 = vadd.f32 0.0, %v2229
    %2231 = vmatmul.bf16.gmra.mxu0 %v2083
    %v2232 = vpop.f32.mrf.mxu0
    %v2233 = vadd.f32 0.0, %v2232
    %v2234 = vpop.f32.mrf.mxu0
    %v2235 = vadd.f32 0.0, %v2234
    %2236 = vmatmul.bf16.gmra.mxu0 %v2084
    %v2237 = vpop.f32.mrf.mxu0
    %v2238 = vadd.f32 0.0, %v2237
    %v2239 = vpop.f32.mrf.mxu0
    %v2240 = vadd.f32 0.0, %v2239
    %2241 = vmatmul.bf16.gmra.mxu0 %v2085
    %v2242 = vpop.f32.mrf.mxu0
    %v2243 = vadd.f32 0.0, %v2242
    %v2244 = vpop.f32.mrf.mxu0
    %v2245 = vadd.f32 0.0, %v2244
    %2246 = vmatmul.bf16.gmra.mxu0 %v2086
    %v2247 = vpop.f32.mrf.mxu0
    %v2248 = vadd.f32 0.0, %v2247
    %v2249 = vpop.f32.mrf.mxu0
    %v2250 = vadd.f32 0.0, %v2249
    %2251 = vmatmul.bf16.gmra.mxu0 %v2087
    %v2252 = vpop.f32.mrf.mxu0
    %v2253 = vadd.f32 0.0, %v2252
    %v2254 = vpop.f32.mrf.mxu0
    %v2255 = vadd.f32 0.0, %v2254
    %2256 = vmatmul.bf16.gmra.mxu0 %v2088
    %v2257 = vpop.f32.mrf.mxu0
    %v2258 = vadd.f32 0.0, %v2257
    %v2259 = vpop.f32.mrf.mxu0
    %v2260 = vadd.f32 0.0, %v2259
    %2261 = vmatmul.bf16.gmra.mxu0 %v2089
    %v2262 = vpop.f32.mrf.mxu0
    %v2263 = vadd.f32 0.0, %v2262
    %v2264 = vpop.f32.mrf.mxu0
    %v2265 = vadd.f32 0.0, %v2264
    %2266 = vmatmul.bf16.gmra.mxu0 %v2090
    %v2267 = vpop.f32.mrf.mxu0
    %v2268 = vadd.f32 0.0, %v2267
    %v2269 = vpop.f32.mrf.mxu0
    %v2270 = vadd.f32 0.0, %v2269
    %2271 = vmatmul.bf16.gmra.mxu0 %v2091
    %v2272 = vpop.f32.mrf.mxu0
    %v2273 = vadd.f32 0.0, %v2272
    %v2274 = vpop.f32.mrf.mxu0
    %v2275 = vadd.f32 0.0, %v2274
    %2276 = vmatmul.bf16.gmra.mxu0 %v2092
    %v2277 = vpop.f32.mrf.mxu0
    %v2278 = vadd.f32 0.0, %v2277
    %v2279 = vpop.f32.mrf.mxu0
    %v2280 = vadd.f32 0.0, %v2279
    %2281 = vmatmul.bf16.gmra.mxu0 %v2093
    %v2282 = vpop.f32.mrf.mxu0
    %v2283 = vadd.f32 0.0, %v2282
    %v2284 = vpop.f32.mrf.mxu0
    %v2285 = vadd.f32 0.0, %v2284
    %2286 = vmatmul.bf16.gmra.mxu0 %v2094
    %v2287 = vpop.f32.mrf.mxu0
    %v2288 = vadd.f32 0.0, %v2287
    %v2289 = vpop.f32.mrf.mxu0
    %v2290 = vadd.f32 0.0, %v2289
    %2291 = vmatmul.bf16.gmra.mxu0 %v2095
    %v2292 = vpop.f32.mrf.mxu0
    %v2293 = vadd.f32 0.0, %v2292
    %v2294 = vpop.f32.mrf.mxu0
    %v2295 = vadd.f32 0.0, %v2294
    %2296 = vmatmul.bf16.gmra.mxu0 %v2096
    %v2297 = vpop.f32.mrf.mxu0
    %v2298 = vadd.f32 0.0, %v2297
    %v2299 = vpop.f32.mrf.mxu0
    %v2300 = vadd.f32 0.0, %v2299
    %2301 = vmatmul.bf16.gmra.mxu0 %v2097
    %v2302 = vpop.f32.mrf.mxu0
    %v2303 = vadd.f32 0.0, %v2302
    %v2304 = vpop.f32.mrf.mxu0
    %v2305 = vadd.f32 0.0, %v2304
    %2306 = vmatmul.bf16.gmra.mxu0 %v2098
    %v2307 = vpop.f32.mrf.mxu0
    %v2308 = vadd.f32 0.0, %v2307
    %v2309 = vpop.f32.mrf.mxu0
    %v2310 = vadd.f32 0.0, %v2309
    %2311 = vmatmul.bf16.gmra.mxu0 %v2099
    %v2312 = vpop.f32.mrf.mxu0
    %v2313 = vadd.f32 0.0, %v2312
    %v2314 = vpop.f32.mrf.mxu0
    %v2315 = vadd.f32 0.0, %v2314
    %2316 = vmatmul.bf16.gmra.mxu0 %v2100
    %v2317 = vpop.f32.mrf.mxu0
    %v2318 = vadd.f32 0.0, %v2317
    %v2319 = vpop.f32.mrf.mxu0
    %v2320 = vadd.f32 0.0, %v2319
    %2321 = vmatmul.bf16.gmra.mxu0 %v2101
    %v2322 = vpop.f32.mrf.mxu0
    %v2323 = vadd.f32 0.0, %v2322
    %v2324 = vpop.f32.mrf.mxu0
    %v2325 = vadd.f32 0.0, %v2324
    %2326 = vmatmul.bf16.gmra.mxu0 %v2102
    %v2327 = vpop.f32.mrf.mxu0
    %v2328 = vadd.f32 0.0, %v2327
    %v2329 = vpop.f32.mrf.mxu0
    %v2330 = vadd.f32 0.0, %v2329
    %2331 = vmatmul.bf16.gmra.mxu0 %v2103
    %v2332 = vpop.f32.mrf.mxu0
    %v2333 = vadd.f32 0.0, %v2332
    %v2334 = vpop.f32.mrf.mxu0
    %v2335 = vadd.f32 0.0, %v2334
    %2336 = vdwg.mxu0
    %v2337 = vpack.c.bf16 %v2180, %v2178
    %v2338 = vpack.c.bf16 %v2185, %v2183
    %v2339 = vpack.c.bf16 %v2190, %v2188
    %v2340 = vpack.c.bf16 %v2195, %v2193
    %v2341 = vpack.c.bf16 %v2200, %v2198
    %v2342 = vpack.c.bf16 %v2205, %v2203
    %v2343 = vpack.c.bf16 %v2210, %v2208
    %v2344 = vpack.c.bf16 %v2215, %v2213
    %v2345 = vpack.c.bf16 %v2220, %v2218
    %v2346 = vpack.c.bf16 %v2225, %v2223
    %v2347 = vpack.c.bf16 %v2230, %v2228
    %v2348 = vpack.c.bf16 %v2235, %v2233
    %v2349 = vpack.c.bf16 %v2240, %v2238
    %v2350 = vpack.c.bf16 %v2245, %v2243
    %v2351 = vpack.c.bf16 %v2250, %v2248
    %v2352 = vpack.c.bf16 %v2255, %v2253
    %v2353 = vpack.c.bf16 %v2260, %v2258
    %v2354 = vpack.c.bf16 %v2265, %v2263
    %v2355 = vpack.c.bf16 %v2270, %v2268
    %v2356 = vpack.c.bf16 %v2275, %v2273
    %v2357 = vpack.c.bf16 %v2280, %v2278
    %v2358 = vpack.c.bf16 %v2285, %v2283
    %v2359 = vpack.c.bf16 %v2290, %v2288
    %v2360 = vpack.c.bf16 %v2295, %v2293
    %v2361 = vpack.c.bf16 %v2300, %v2298
    %v2362 = vpack.c.bf16 %v2305, %v2303
    %v2363 = vpack.c.bf16 %v2310, %v2308
    %v2364 = vpack.c.bf16 %v2315, %v2313
    %v2365 = vpack.c.bf16 %v2320, %v2318
    %v2366 = vpack.c.bf16 %v2325, %v2323
    %v2367 = vpack.c.bf16 %v2330, %v2328
    %v2368 = vpack.c.bf16 %v2335, %v2333
    %v2369 = vld [vmem:[%s5] sm:$0x1]
    %v2371 = vperm.slane %v2369, 0
    %2373 = vmatpush.bf16.msra.mxu0 %v2344
    %2374 = vmatpush.bf16.msra.mxu0 %v2343
    %2375 = vmatpush.bf16.msra.mxu0 %v2342
    %2376 = vmatpush.bf16.msra.mxu0 %v2341
    %2377 = vmatpush.bf16.msra.mxu0 %v2340
    %2378 = vmatpush.bf16.msra.mxu0 %v2339
    %2379 = vmatpush.bf16.msra.mxu0 %v2338
    %2380 = vmatpush.bf16.msra.mxu0 %v2337
    %2381 = vmatmul.bf16.gmra.mxu0 %v1076
    %v2382 = vpop.f32.mrf.mxu0
    %v2383 = vadd.f32 %v2371, %v2382
    %v2384 = vpop.f32.mrf.mxu0
    %v2385 = vadd.f32 %v2371, %v2384
    %2386 = vmatmul.bf16.gmra.mxu0 %v1080
    %v2387 = vpop.f32.mrf.mxu0
    %v2388 = vadd.f32 %v2371, %v2387
    %v2389 = vpop.f32.mrf.mxu0
    %v2390 = vadd.f32 %v2371, %v2389
    %2391 = vmatmul.bf16.gmra.mxu0 %v1084
    %v2392 = vpop.f32.mrf.mxu0
    %v2393 = vadd.f32 %v2371, %v2392
    %v2394 = vpop.f32.mrf.mxu0
    %v2395 = vadd.f32 %v2371, %v2394
    %2396 = vmatmul.bf16.gmra.mxu0 %v1088
    %v2397 = vpop.f32.mrf.mxu0
    %v2398 = vadd.f32 %v2371, %v2397
    %v2399 = vpop.f32.mrf.mxu0
    %v2400 = vadd.f32 %v2371, %v2399
    %2401 = vmatmul.bf16.gmra.mxu0 %v1092
    %v2402 = vpop.f32.mrf.mxu0
    %v2403 = vadd.f32 %v2371, %v2402
    %v2404 = vpop.f32.mrf.mxu0
    %v2405 = vadd.f32 %v2371, %v2404
    %2406 = vmatmul.bf16.gmra.mxu0 %v1096
    %v2407 = vpop.f32.mrf.mxu0
    %v2408 = vadd.f32 %v2371, %v2407
    %v2409 = vpop.f32.mrf.mxu0
    %v2410 = vadd.f32 %v2371, %v2409
    %2411 = vmatmul.bf16.gmra.mxu0 %v1100
    %v2412 = vpop.f32.mrf.mxu0
    %v2413 = vadd.f32 %v2371, %v2412
    %v2414 = vpop.f32.mrf.mxu0
    %v2415 = vadd.f32 %v2371, %v2414
    %2416 = vmatmul.bf16.gmra.mxu0 %v1104
    %v2417 = vpop.f32.mrf.mxu0
    %v2418 = vadd.f32 %v2371, %v2417
    %v2419 = vpop.f32.mrf.mxu0
    %v2420 = vadd.f32 %v2371, %v2419
    %2421 = vmatmul.bf16.gmra.mxu0 %v1108
    %v2422 = vpop.f32.mrf.mxu0
    %v2423 = vadd.f32 %v2371, %v2422
    %v2424 = vpop.f32.mrf.mxu0
    %v2425 = vadd.f32 %v2371, %v2424
    %2426 = vmatmul.bf16.gmra.mxu0 %v1112
    %v2427 = vpop.f32.mrf.mxu0
    %v2428 = vadd.f32 %v2371, %v2427
    %v2429 = vpop.f32.mrf.mxu0
    %v2430 = vadd.f32 %v2371, %v2429
    %2431 = vmatmul.bf16.gmra.mxu0 %v1116
    %v2432 = vpop.f32.mrf.mxu0
    %v2433 = vadd.f32 %v2371, %v2432
    %v2434 = vpop.f32.mrf.mxu0
    %v2435 = vadd.f32 %v2371, %v2434
    %2436 = vmatmul.bf16.gmra.mxu0 %v1120
    %v2437 = vpop.f32.mrf.mxu0
    %v2438 = vadd.f32 %v2371, %v2437
    %v2439 = vpop.f32.mrf.mxu0
    %v2440 = vadd.f32 %v2371, %v2439
    %2441 = vmatmul.bf16.gmra.mxu0 %v1124
    %v2442 = vpop.f32.mrf.mxu0
    %v2443 = vadd.f32 %v2371, %v2442
    %v2444 = vpop.f32.mrf.mxu0
    %v2445 = vadd.f32 %v2371, %v2444
    %2446 = vmatmul.bf16.gmra.mxu0 %v1128
    %v2447 = vpop.f32.mrf.mxu0
    %v2448 = vadd.f32 %v2371, %v2447
    %v2449 = vpop.f32.mrf.mxu0
    %v2450 = vadd.f32 %v2371, %v2449
    %2451 = vmatmul.bf16.gmra.mxu0 %v1132
    %v2452 = vpop.f32.mrf.mxu0
    %v2453 = vadd.f32 %v2371, %v2452
    %v2454 = vpop.f32.mrf.mxu0
    %v2455 = vadd.f32 %v2371, %v2454
    %2456 = vmatmul.bf16.gmra.mxu0 %v1136
    %v2457 = vpop.f32.mrf.mxu0
    %v2458 = vadd.f32 %v2371, %v2457
    %v2459 = vpop.f32.mrf.mxu0
    %v2460 = vadd.f32 %v2371, %v2459
    %2461 = vmatmul.bf16.gmra.mxu0 %v1140
    %v2462 = vpop.f32.mrf.mxu0
    %v2463 = vadd.f32 %v2371, %v2462
    %v2464 = vpop.f32.mrf.mxu0
    %v2465 = vadd.f32 %v2371, %v2464
    %2466 = vmatmul.bf16.gmra.mxu0 %v1144
    %v2467 = vpop.f32.mrf.mxu0
    %v2468 = vadd.f32 %v2371, %v2467
    %v2469 = vpop.f32.mrf.mxu0
    %v2470 = vadd.f32 %v2371, %v2469
    %2471 = vmatmul.bf16.gmra.mxu0 %v1148
    %v2472 = vpop.f32.mrf.mxu0
    %v2473 = vadd.f32 %v2371, %v2472
    %v2474 = vpop.f32.mrf.mxu0
    %v2475 = vadd.f32 %v2371, %v2474
    %2476 = vmatmul.bf16.gmra.mxu0 %v1152
    %v2477 = vpop.f32.mrf.mxu0
    %v2478 = vadd.f32 %v2371, %v2477
    %v2479 = vpop.f32.mrf.mxu0
    %v2480 = vadd.f32 %v2371, %v2479
    %2481 = vmatmul.bf16.gmra.mxu0 %v1156
    %v2482 = vpop.f32.mrf.mxu0
    %v2483 = vadd.f32 %v2371, %v2482
    %v2484 = vpop.f32.mrf.mxu0
    %v2485 = vadd.f32 %v2371, %v2484
    %2486 = vmatmul.bf16.gmra.mxu0 %v1160
    %v2487 = vpop.f32.mrf.mxu0
    %v2488 = vadd.f32 %v2371, %v2487
    %v2489 = vpop.f32.mrf.mxu0
    %v2490 = vadd.f32 %v2371, %v2489
    %2491 = vmatmul.bf16.gmra.mxu0 %v1164
    %v2492 = vpop.f32.mrf.mxu0
    %v2493 = vadd.f32 %v2371, %v2492
    %v2494 = vpop.f32.mrf.mxu0
    %v2495 = vadd.f32 %v2371, %v2494
    %2496 = vmatmul.bf16.gmra.mxu0 %v1168
    %v2497 = vpop.f32.mrf.mxu0
    %v2498 = vadd.f32 %v2371, %v2497
    %v2499 = vpop.f32.mrf.mxu0
    %v2500 = vadd.f32 %v2371, %v2499
    %2501 = vmatmul.bf16.gmra.mxu0 %v1172
    %v2502 = vpop.f32.mrf.mxu0
    %v2503 = vadd.f32 %v2371, %v2502
    %v2504 = vpop.f32.mrf.mxu0
    %v2505 = vadd.f32 %v2371, %v2504
    %2506 = vmatmul.bf16.gmra.mxu0 %v1176
    %v2507 = vpop.f32.mrf.mxu0
    %v2508 = vadd.f32 %v2371, %v2507
    %v2509 = vpop.f32.mrf.mxu0
    %v2510 = vadd.f32 %v2371, %v2509
    %2511 = vmatmul.bf16.gmra.mxu0 %v1180
    %v2512 = vpop.f32.mrf.mxu0
    %v2513 = vadd.f32 %v2371, %v2512
    %v2514 = vpop.f32.mrf.mxu0
    %v2515 = vadd.f32 %v2371, %v2514
    %2516 = vmatmul.bf16.gmra.mxu0 %v1184
    %v2517 = vpop.f32.mrf.mxu0
    %v2518 = vadd.f32 %v2371, %v2517
    %v2519 = vpop.f32.mrf.mxu0
    %v2520 = vadd.f32 %v2371, %v2519
    %2521 = vmatmul.bf16.gmra.mxu0 %v1188
    %v2522 = vpop.f32.mrf.mxu0
    %v2523 = vadd.f32 %v2371, %v2522
    %v2524 = vpop.f32.mrf.mxu0
    %v2525 = vadd.f32 %v2371, %v2524
    %2526 = vmatmul.bf16.gmra.mxu0 %v1192
    %v2527 = vpop.f32.mrf.mxu0
    %v2528 = vadd.f32 %v2371, %v2527
    %v2529 = vpop.f32.mrf.mxu0
    %v2530 = vadd.f32 %v2371, %v2529
    %2531 = vmatmul.bf16.gmra.mxu0 %v1196
    %v2532 = vpop.f32.mrf.mxu0
    %v2533 = vadd.f32 %v2371, %v2532
    %v2534 = vpop.f32.mrf.mxu0
    %v2535 = vadd.f32 %v2371, %v2534
    %2536 = vmatmul.bf16.gmra.mxu0 %v1200
    %v2537 = vpop.f32.mrf.mxu0
    %v2538 = vadd.f32 %v2371, %v2537
    %v2539 = vpop.f32.mrf.mxu0
    %v2540 = vadd.f32 %v2371, %v2539
    %2541 = vdwg.mxu0
    %2542 = vmatpush.bf16.msra.mxu0 %v2352
    %2543 = vmatpush.bf16.msra.mxu0 %v2351
    %2544 = vmatpush.bf16.msra.mxu0 %v2350
    %2545 = vmatpush.bf16.msra.mxu0 %v2349
    %2546 = vmatpush.bf16.msra.mxu0 %v2348
    %2547 = vmatpush.bf16.msra.mxu0 %v2347
    %2548 = vmatpush.bf16.msra.mxu0 %v2346
    %2549 = vmatpush.bf16.msra.mxu0 %v2345
    %2550 = vmatmul.bf16.gmra.mxu0 %v1077
    %v2551 = vpop.f32.mrf.mxu0
    %v2552 = vadd.f32 %v2383, %v2551
    %v2553 = vpop.f32.mrf.mxu0
    %v2554 = vadd.f32 %v2385, %v2553
    %2555 = vmatmul.bf16.gmra.mxu0 %v1081
    %v2556 = vpop.f32.mrf.mxu0
    %v2557 = vadd.f32 %v2388, %v2556
    %v2558 = vpop.f32.mrf.mxu0
    %v2559 = vadd.f32 %v2390, %v2558
    %2560 = vmatmul.bf16.gmra.mxu0 %v1085
    %v2561 = vpop.f32.mrf.mxu0
    %v2562 = vadd.f32 %v2393, %v2561
    %v2563 = vpop.f32.mrf.mxu0
    %v2564 = vadd.f32 %v2395, %v2563
    %2565 = vmatmul.bf16.gmra.mxu0 %v1089
    %v2566 = vpop.f32.mrf.mxu0
    %v2567 = vadd.f32 %v2398, %v2566
    %v2568 = vpop.f32.mrf.mxu0
    %v2569 = vadd.f32 %v2400, %v2568
    %2570 = vmatmul.bf16.gmra.mxu0 %v1093
    %v2571 = vpop.f32.mrf.mxu0
    %v2572 = vadd.f32 %v2403, %v2571
    %v2573 = vpop.f32.mrf.mxu0
    %v2574 = vadd.f32 %v2405, %v2573
    %2575 = vmatmul.bf16.gmra.mxu0 %v1097
    %v2576 = vpop.f32.mrf.mxu0
    %v2577 = vadd.f32 %v2408, %v2576
    %v2578 = vpop.f32.mrf.mxu0
    %v2579 = vadd.f32 %v2410, %v2578
    %2580 = vmatmul.bf16.gmra.mxu0 %v1101
    %v2581 = vpop.f32.mrf.mxu0
    %v2582 = vadd.f32 %v2413, %v2581
    %v2583 = vpop.f32.mrf.mxu0
    %v2584 = vadd.f32 %v2415, %v2583
    %2585 = vmatmul.bf16.gmra.mxu0 %v1105
    %v2586 = vpop.f32.mrf.mxu0
    %v2587 = vadd.f32 %v2418, %v2586
    %v2588 = vpop.f32.mrf.mxu0
    %v2589 = vadd.f32 %v2420, %v2588
    %2590 = vmatmul.bf16.gmra.mxu0 %v1109
    %v2591 = vpop.f32.mrf.mxu0
    %v2592 = vadd.f32 %v2423, %v2591
    %v2593 = vpop.f32.mrf.mxu0
    %v2594 = vadd.f32 %v2425, %v2593
    %2595 = vmatmul.bf16.gmra.mxu0 %v1113
    %v2596 = vpop.f32.mrf.mxu0
    %v2597 = vadd.f32 %v2428, %v2596
    %v2598 = vpop.f32.mrf.mxu0
    %v2599 = vadd.f32 %v2430, %v2598
    %2600 = vmatmul.bf16.gmra.mxu0 %v1117
    %v2601 = vpop.f32.mrf.mxu0
    %v2602 = vadd.f32 %v2433, %v2601
    %v2603 = vpop.f32.mrf.mxu0
    %v2604 = vadd.f32 %v2435, %v2603
    %2605 = vmatmul.bf16.gmra.mxu0 %v1121
    %v2606 = vpop.f32.mrf.mxu0
    %v2607 = vadd.f32 %v2438, %v2606
    %v2608 = vpop.f32.mrf.mxu0
    %v2609 = vadd.f32 %v2440, %v2608
    %2610 = vmatmul.bf16.gmra.mxu0 %v1125
    %v2611 = vpop.f32.mrf.mxu0
    %v2612 = vadd.f32 %v2443, %v2611
    %v2613 = vpop.f32.mrf.mxu0
    %v2614 = vadd.f32 %v2445, %v2613
    %2615 = vmatmul.bf16.gmra.mxu0 %v1129
    %v2616 = vpop.f32.mrf.mxu0
    %v2617 = vadd.f32 %v2448, %v2616
    %v2618 = vpop.f32.mrf.mxu0
    %v2619 = vadd.f32 %v2450, %v2618
    %2620 = vmatmul.bf16.gmra.mxu0 %v1133
    %v2621 = vpop.f32.mrf.mxu0
    %v2622 = vadd.f32 %v2453, %v2621
    %v2623 = vpop.f32.mrf.mxu0
    %v2624 = vadd.f32 %v2455, %v2623
    %2625 = vmatmul.bf16.gmra.mxu0 %v1137
    %v2626 = vpop.f32.mrf.mxu0
    %v2627 = vadd.f32 %v2458, %v2626
    %v2628 = vpop.f32.mrf.mxu0
    %v2629 = vadd.f32 %v2460, %v2628
    %2630 = vmatmul.bf16.gmra.mxu0 %v1141
    %v2631 = vpop.f32.mrf.mxu0
    %v2632 = vadd.f32 %v2463, %v2631
    %v2633 = vpop.f32.mrf.mxu0
    %v2634 = vadd.f32 %v2465, %v2633
    %2635 = vmatmul.bf16.gmra.mxu0 %v1145
    %v2636 = vpop.f32.mrf.mxu0
    %v2637 = vadd.f32 %v2468, %v2636
    %v2638 = vpop.f32.mrf.mxu0
    %v2639 = vadd.f32 %v2470, %v2638
    %2640 = vmatmul.bf16.gmra.mxu0 %v1149
    %v2641 = vpop.f32.mrf.mxu0
    %v2642 = vadd.f32 %v2473, %v2641
    %v2643 = vpop.f32.mrf.mxu0
    %v2644 = vadd.f32 %v2475, %v2643
    %2645 = vmatmul.bf16.gmra.mxu0 %v1153
    %v2646 = vpop.f32.mrf.mxu0
    %v2647 = vadd.f32 %v2478, %v2646
    %v2648 = vpop.f32.mrf.mxu0
    %v2649 = vadd.f32 %v2480, %v2648
    %2650 = vmatmul.bf16.gmra.mxu0 %v1157
    %v2651 = vpop.f32.mrf.mxu0
    %v2652 = vadd.f32 %v2483, %v2651
    %v2653 = vpop.f32.mrf.mxu0
    %v2654 = vadd.f32 %v2485, %v2653
    %2655 = vmatmul.bf16.gmra.mxu0 %v1161
    %v2656 = vpop.f32.mrf.mxu0
    %v2657 = vadd.f32 %v2488, %v2656
    %v2658 = vpop.f32.mrf.mxu0
    %v2659 = vadd.f32 %v2490, %v2658
    %2660 = vmatmul.bf16.gmra.mxu0 %v1165
    %v2661 = vpop.f32.mrf.mxu0
    %v2662 = vadd.f32 %v2493, %v2661
    %v2663 = vpop.f32.mrf.mxu0
    %v2664 = vadd.f32 %v2495, %v2663
    %2665 = vmatmul.bf16.gmra.mxu0 %v1169
    %v2666 = vpop.f32.mrf.mxu0
    %v2667 = vadd.f32 %v2498, %v2666
    %v2668 = vpop.f32.mrf.mxu0
    %v2669 = vadd.f32 %v2500, %v2668
    %2670 = vmatmul.bf16.gmra.mxu0 %v1173
    %v2671 = vpop.f32.mrf.mxu0
    %v2672 = vadd.f32 %v2503, %v2671
    %v2673 = vpop.f32.mrf.mxu0
    %v2674 = vadd.f32 %v2505, %v2673
    %2675 = vmatmul.bf16.gmra.mxu0 %v1177
    %v2676 = vpop.f32.mrf.mxu0
    %v2677 = vadd.f32 %v2508, %v2676
    %v2678 = vpop.f32.mrf.mxu0
    %v2679 = vadd.f32 %v2510, %v2678
    %2680 = vmatmul.bf16.gmra.mxu0 %v1181
    %v2681 = vpop.f32.mrf.mxu0
    %v2682 = vadd.f32 %v2513, %v2681
    %v2683 = vpop.f32.mrf.mxu0
    %v2684 = vadd.f32 %v2515, %v2683
    %2685 = vmatmul.bf16.gmra.mxu0 %v1185
    %v2686 = vpop.f32.mrf.mxu0
    %v2687 = vadd.f32 %v2518, %v2686
    %v2688 = vpop.f32.mrf.mxu0
    %v2689 = vadd.f32 %v2520, %v2688
    %2690 = vmatmul.bf16.gmra.mxu0 %v1189
    %v2691 = vpop.f32.mrf.mxu0
    %v2692 = vadd.f32 %v2523, %v2691
    %v2693 = vpop.f32.mrf.mxu0
    %v2694 = vadd.f32 %v2525, %v2693
    %2695 = vmatmul.bf16.gmra.mxu0 %v1193
    %v2696 = vpop.f32.mrf.mxu0
    %v2697 = vadd.f32 %v2528, %v2696
    %v2698 = vpop.f32.mrf.mxu0
    %v2699 = vadd.f32 %v2530, %v2698
    %2700 = vmatmul.bf16.gmra.mxu0 %v1197
    %v2701 = vpop.f32.mrf.mxu0
    %v2702 = vadd.f32 %v2533, %v2701
    %v2703 = vpop.f32.mrf.mxu0
    %v2704 = vadd.f32 %v2535, %v2703
    %2705 = vmatmul.bf16.gmra.mxu0 %v1201
    %v2706 = vpop.f32.mrf.mxu0
    %v2707 = vadd.f32 %v2538, %v2706
    %v2708 = vpop.f32.mrf.mxu0
    %v2709 = vadd.f32 %v2540, %v2708
    %2710 = vdwg.mxu0
    %2711 = vmatpush.bf16.msra.mxu0 %v2360
    %2712 = vmatpush.bf16.msra.mxu0 %v2359
    %2713 = vmatpush.bf16.msra.mxu0 %v2358
    %2714 = vmatpush.bf16.msra.mxu0 %v2357
    %2715 = vmatpush.bf16.msra.mxu0 %v2356
    %2716 = vmatpush.bf16.msra.mxu0 %v2355
    %2717 = vmatpush.bf16.msra.mxu0 %v2354
    %2718 = vmatpush.bf16.msra.mxu0 %v2353
    %2719 = vmatmul.bf16.gmra.mxu0 %v1078
    %v2720 = vpop.f32.mrf.mxu0
    %v2721 = vadd.f32 %v2552, %v2720
    %v2722 = vpop.f32.mrf.mxu0
    %v2723 = vadd.f32 %v2554, %v2722
    %2724 = vmatmul.bf16.gmra.mxu0 %v1082
    %v2725 = vpop.f32.mrf.mxu0
    %v2726 = vadd.f32 %v2557, %v2725
    %v2727 = vpop.f32.mrf.mxu0
    %v2728 = vadd.f32 %v2559, %v2727
    %2729 = vmatmul.bf16.gmra.mxu0 %v1086
    %v2730 = vpop.f32.mrf.mxu0
    %v2731 = vadd.f32 %v2562, %v2730
    %v2732 = vpop.f32.mrf.mxu0
    %v2733 = vadd.f32 %v2564, %v2732
    %2734 = vmatmul.bf16.gmra.mxu0 %v1090
    %v2735 = vpop.f32.mrf.mxu0
    %v2736 = vadd.f32 %v2567, %v2735
    %v2737 = vpop.f32.mrf.mxu0
    %v2738 = vadd.f32 %v2569, %v2737
    %2739 = vmatmul.bf16.gmra.mxu0 %v1094
    %v2740 = vpop.f32.mrf.mxu0
    %v2741 = vadd.f32 %v2572, %v2740
    %v2742 = vpop.f32.mrf.mxu0
    %v2743 = vadd.f32 %v2574, %v2742
    %2744 = vmatmul.bf16.gmra.mxu0 %v1098
    %v2745 = vpop.f32.mrf.mxu0
    %v2746 = vadd.f32 %v2577, %v2745
    %v2747 = vpop.f32.mrf.mxu0
    %v2748 = vadd.f32 %v2579, %v2747
    %2749 = vmatmul.bf16.gmra.mxu0 %v1102
    %v2750 = vpop.f32.mrf.mxu0
    %v2751 = vadd.f32 %v2582, %v2750
    %v2752 = vpop.f32.mrf.mxu0
    %v2753 = vadd.f32 %v2584, %v2752
    %2754 = vmatmul.bf16.gmra.mxu0 %v1106
    %v2755 = vpop.f32.mrf.mxu0
    %v2756 = vadd.f32 %v2587, %v2755
    %v2757 = vpop.f32.mrf.mxu0
    %v2758 = vadd.f32 %v2589, %v2757
    %2759 = vmatmul.bf16.gmra.mxu0 %v1110
    %v2760 = vpop.f32.mrf.mxu0
    %v2761 = vadd.f32 %v2592, %v2760
    %v2762 = vpop.f32.mrf.mxu0
    %v2763 = vadd.f32 %v2594, %v2762
    %2764 = vmatmul.bf16.gmra.mxu0 %v1114
    %v2765 = vpop.f32.mrf.mxu0
    %v2766 = vadd.f32 %v2597, %v2765
    %v2767 = vpop.f32.mrf.mxu0
    %v2768 = vadd.f32 %v2599, %v2767
    %2769 = vmatmul.bf16.gmra.mxu0 %v1118
    %v2770 = vpop.f32.mrf.mxu0
    %v2771 = vadd.f32 %v2602, %v2770
    %v2772 = vpop.f32.mrf.mxu0
    %v2773 = vadd.f32 %v2604, %v2772
    %2774 = vmatmul.bf16.gmra.mxu0 %v1122
    %v2775 = vpop.f32.mrf.mxu0
    %v2776 = vadd.f32 %v2607, %v2775
    %v2777 = vpop.f32.mrf.mxu0
    %v2778 = vadd.f32 %v2609, %v2777
    %2779 = vmatmul.bf16.gmra.mxu0 %v1126
    %v2780 = vpop.f32.mrf.mxu0
    %v2781 = vadd.f32 %v2612, %v2780
    %v2782 = vpop.f32.mrf.mxu0
    %v2783 = vadd.f32 %v2614, %v2782
    %2784 = vmatmul.bf16.gmra.mxu0 %v1130
    %v2785 = vpop.f32.mrf.mxu0
    %v2786 = vadd.f32 %v2617, %v2785
    %v2787 = vpop.f32.mrf.mxu0
    %v2788 = vadd.f32 %v2619, %v2787
    %2789 = vmatmul.bf16.gmra.mxu0 %v1134
    %v2790 = vpop.f32.mrf.mxu0
    %v2791 = vadd.f32 %v2622, %v2790
    %v2792 = vpop.f32.mrf.mxu0
    %v2793 = vadd.f32 %v2624, %v2792
    %2794 = vmatmul.bf16.gmra.mxu0 %v1138
    %v2795 = vpop.f32.mrf.mxu0
    %v2796 = vadd.f32 %v2627, %v2795
    %v2797 = vpop.f32.mrf.mxu0
    %v2798 = vadd.f32 %v2629, %v2797
    %2799 = vmatmul.bf16.gmra.mxu0 %v1142
    %v2800 = vpop.f32.mrf.mxu0
    %v2801 = vadd.f32 %v2632, %v2800
    %v2802 = vpop.f32.mrf.mxu0
    %v2803 = vadd.f32 %v2634, %v2802
    %2804 = vmatmul.bf16.gmra.mxu0 %v1146
    %v2805 = vpop.f32.mrf.mxu0
    %v2806 = vadd.f32 %v2637, %v2805
    %v2807 = vpop.f32.mrf.mxu0
    %v2808 = vadd.f32 %v2639, %v2807
    %2809 = vmatmul.bf16.gmra.mxu0 %v1150
    %v2810 = vpop.f32.mrf.mxu0
    %v2811 = vadd.f32 %v2642, %v2810
    %v2812 = vpop.f32.mrf.mxu0
    %v2813 = vadd.f32 %v2644, %v2812
    %2814 = vmatmul.bf16.gmra.mxu0 %v1154
    %v2815 = vpop.f32.mrf.mxu0
    %v2816 = vadd.f32 %v2647, %v2815
    %v2817 = vpop.f32.mrf.mxu0
    %v2818 = vadd.f32 %v2649, %v2817
    %2819 = vmatmul.bf16.gmra.mxu0 %v1158
    %v2820 = vpop.f32.mrf.mxu0
    %v2821 = vadd.f32 %v2652, %v2820
    %v2822 = vpop.f32.mrf.mxu0
    %v2823 = vadd.f32 %v2654, %v2822
    %2824 = vmatmul.bf16.gmra.mxu0 %v1162
    %v2825 = vpop.f32.mrf.mxu0
    %v2826 = vadd.f32 %v2657, %v2825
    %v2827 = vpop.f32.mrf.mxu0
    %v2828 = vadd.f32 %v2659, %v2827
    %2829 = vmatmul.bf16.gmra.mxu0 %v1166
    %v2830 = vpop.f32.mrf.mxu0
    %v2831 = vadd.f32 %v2662, %v2830
    %v2832 = vpop.f32.mrf.mxu0
    %v2833 = vadd.f32 %v2664, %v2832
    %2834 = vmatmul.bf16.gmra.mxu0 %v1170
    %v2835 = vpop.f32.mrf.mxu0
    %v2836 = vadd.f32 %v2667, %v2835
    %v2837 = vpop.f32.mrf.mxu0
    %v2838 = vadd.f32 %v2669, %v2837
    %2839 = vmatmul.bf16.gmra.mxu0 %v1174
    %v2840 = vpop.f32.mrf.mxu0
    %v2841 = vadd.f32 %v2672, %v2840
    %v2842 = vpop.f32.mrf.mxu0
    %v2843 = vadd.f32 %v2674, %v2842
    %2844 = vmatmul.bf16.gmra.mxu0 %v1178
    %v2845 = vpop.f32.mrf.mxu0
    %v2846 = vadd.f32 %v2677, %v2845
    %v2847 = vpop.f32.mrf.mxu0
    %v2848 = vadd.f32 %v2679, %v2847
    %2849 = vmatmul.bf16.gmra.mxu0 %v1182
    %v2850 = vpop.f32.mrf.mxu0
    %v2851 = vadd.f32 %v2682, %v2850
    %v2852 = vpop.f32.mrf.mxu0
    %v2853 = vadd.f32 %v2684, %v2852
    %2854 = vmatmul.bf16.gmra.mxu0 %v1186
    %v2855 = vpop.f32.mrf.mxu0
    %v2856 = vadd.f32 %v2687, %v2855
    %v2857 = vpop.f32.mrf.mxu0
    %v2858 = vadd.f32 %v2689, %v2857
    %2859 = vmatmul.bf16.gmra.mxu0 %v1190
    %v2860 = vpop.f32.mrf.mxu0
    %v2861 = vadd.f32 %v2692, %v2860
    %v2862 = vpop.f32.mrf.mxu0
    %v2863 = vadd.f32 %v2694, %v2862
    %2864 = vmatmul.bf16.gmra.mxu0 %v1194
    %v2865 = vpop.f32.mrf.mxu0
    %v2866 = vadd.f32 %v2697, %v2865
    %v2867 = vpop.f32.mrf.mxu0
    %v2868 = vadd.f32 %v2699, %v2867
    %2869 = vmatmul.bf16.gmra.mxu0 %v1198
    %v2870 = vpop.f32.mrf.mxu0
    %v2871 = vadd.f32 %v2702, %v2870
    %v2872 = vpop.f32.mrf.mxu0
    %v2873 = vadd.f32 %v2704, %v2872
    %2874 = vmatmul.bf16.gmra.mxu0 %v1202
    %v2875 = vpop.f32.mrf.mxu0
    %v2876 = vadd.f32 %v2707, %v2875
    %v2877 = vpop.f32.mrf.mxu0
    %v2878 = vadd.f32 %v2709, %v2877
    %2879 = vdwg.mxu0
    %2880 = vmatpush.bf16.msra.mxu0 %v2368
    %2881 = vmatpush.bf16.msra.mxu0 %v2367
    %2882 = vmatpush.bf16.msra.mxu0 %v2366
    %2883 = vmatpush.bf16.msra.mxu0 %v2365
    %2884 = vmatpush.bf16.msra.mxu0 %v2364
    %2885 = vmatpush.bf16.msra.mxu0 %v2363
    %2886 = vmatpush.bf16.msra.mxu0 %v2362
    %2887 = vmatpush.bf16.msra.mxu0 %v2361
    %2888 = vmatmul.bf16.gmra.mxu0 %v1079
    %v2889 = vpop.f32.mrf.mxu0
    %v2890 = vadd.f32 %v2721, %v2889
    %v2891 = vpop.f32.mrf.mxu0
    %v2892 = vadd.f32 %v2723, %v2891
    %2893 = vmatmul.bf16.gmra.mxu0 %v1083
    %v2894 = vpop.f32.mrf.mxu0
    %v2895 = vadd.f32 %v2726, %v2894
    %v2896 = vpop.f32.mrf.mxu0
    %v2897 = vadd.f32 %v2728, %v2896
    %2898 = vmatmul.bf16.gmra.mxu0 %v1087
    %v2899 = vpop.f32.mrf.mxu0
    %v2900 = vadd.f32 %v2731, %v2899
    %v2901 = vpop.f32.mrf.mxu0
    %v2902 = vadd.f32 %v2733, %v2901
    %2903 = vmatmul.bf16.gmra.mxu0 %v1091
    %v2904 = vpop.f32.mrf.mxu0
    %v2905 = vadd.f32 %v2736, %v2904
    %v2906 = vpop.f32.mrf.mxu0
    %v2907 = vadd.f32 %v2738, %v2906
    %2908 = vmatmul.bf16.gmra.mxu0 %v1095
    %v2909 = vpop.f32.mrf.mxu0
    %v2910 = vadd.f32 %v2741, %v2909
    %v2911 = vpop.f32.mrf.mxu0
    %v2912 = vadd.f32 %v2743, %v2911
    %2913 = vmatmul.bf16.gmra.mxu0 %v1099
    %v2914 = vpop.f32.mrf.mxu0
    %v2915 = vadd.f32 %v2746, %v2914
    %v2916 = vpop.f32.mrf.mxu0
    %v2917 = vadd.f32 %v2748, %v2916
    %2918 = vmatmul.bf16.gmra.mxu0 %v1103
    %v2919 = vpop.f32.mrf.mxu0
    %v2920 = vadd.f32 %v2751, %v2919
    %v2921 = vpop.f32.mrf.mxu0
    %v2922 = vadd.f32 %v2753, %v2921
    %2923 = vmatmul.bf16.gmra.mxu0 %v1107
    %v2924 = vpop.f32.mrf.mxu0
    %v2925 = vadd.f32 %v2756, %v2924
    %v2926 = vpop.f32.mrf.mxu0
    %v2927 = vadd.f32 %v2758, %v2926
    %2928 = vmatmul.bf16.gmra.mxu0 %v1111
    %v2929 = vpop.f32.mrf.mxu0
    %v2930 = vadd.f32 %v2761, %v2929
    %v2931 = vpop.f32.mrf.mxu0
    %v2932 = vadd.f32 %v2763, %v2931
    %2933 = vmatmul.bf16.gmra.mxu0 %v1115
    %v2934 = vpop.f32.mrf.mxu0
    %v2935 = vadd.f32 %v2766, %v2934
    %v2936 = vpop.f32.mrf.mxu0
    %v2937 = vadd.f32 %v2768, %v2936
    %2938 = vmatmul.bf16.gmra.mxu0 %v1119
    %v2939 = vpop.f32.mrf.mxu0
    %v2940 = vadd.f32 %v2771, %v2939
    %v2941 = vpop.f32.mrf.mxu0
    %v2942 = vadd.f32 %v2773, %v2941
    %2943 = vmatmul.bf16.gmra.mxu0 %v1123
    %v2944 = vpop.f32.mrf.mxu0
    %v2945 = vadd.f32 %v2776, %v2944
    %v2946 = vpop.f32.mrf.mxu0
    %v2947 = vadd.f32 %v2778, %v2946
    %2948 = vmatmul.bf16.gmra.mxu0 %v1127
    %v2949 = vpop.f32.mrf.mxu0
    %v2950 = vadd.f32 %v2781, %v2949
    %v2951 = vpop.f32.mrf.mxu0
    %v2952 = vadd.f32 %v2783, %v2951
    %2953 = vmatmul.bf16.gmra.mxu0 %v1131
    %v2954 = vpop.f32.mrf.mxu0
    %v2955 = vadd.f32 %v2786, %v2954
    %v2956 = vpop.f32.mrf.mxu0
    %v2957 = vadd.f32 %v2788, %v2956
    %2958 = vmatmul.bf16.gmra.mxu0 %v1135
    %v2959 = vpop.f32.mrf.mxu0
    %v2960 = vadd.f32 %v2791, %v2959
    %v2961 = vpop.f32.mrf.mxu0
    %v2962 = vadd.f32 %v2793, %v2961
    %2963 = vmatmul.bf16.gmra.mxu0 %v1139
    %v2964 = vpop.f32.mrf.mxu0
    %v2965 = vadd.f32 %v2796, %v2964
    %v2966 = vpop.f32.mrf.mxu0
    %v2967 = vadd.f32 %v2798, %v2966
    %2968 = vmatmul.bf16.gmra.mxu0 %v1143
    %v2969 = vpop.f32.mrf.mxu0
    %v2970 = vadd.f32 %v2801, %v2969
    %v2971 = vpop.f32.mrf.mxu0
    %v2972 = vadd.f32 %v2803, %v2971
    %2973 = vmatmul.bf16.gmra.mxu0 %v1147
    %v2974 = vpop.f32.mrf.mxu0
    %v2975 = vadd.f32 %v2806, %v2974
    %v2976 = vpop.f32.mrf.mxu0
    %v2977 = vadd.f32 %v2808, %v2976
    %2978 = vmatmul.bf16.gmra.mxu0 %v1151
    %v2979 = vpop.f32.mrf.mxu0
    %v2980 = vadd.f32 %v2811, %v2979
    %v2981 = vpop.f32.mrf.mxu0
    %v2982 = vadd.f32 %v2813, %v2981
    %2983 = vmatmul.bf16.gmra.mxu0 %v1155
    %v2984 = vpop.f32.mrf.mxu0
    %v2985 = vadd.f32 %v2816, %v2984
    %v2986 = vpop.f32.mrf.mxu0
    %v2987 = vadd.f32 %v2818, %v2986
    %2988 = vmatmul.bf16.gmra.mxu0 %v1159
    %v2989 = vpop.f32.mrf.mxu0
    %v2990 = vadd.f32 %v2821, %v2989
    %v2991 = vpop.f32.mrf.mxu0
    %v2992 = vadd.f32 %v2823, %v2991
    %2993 = vmatmul.bf16.gmra.mxu0 %v1163
    %v2994 = vpop.f32.mrf.mxu0
    %v2995 = vadd.f32 %v2826, %v2994
    %v2996 = vpop.f32.mrf.mxu0
    %v2997 = vadd.f32 %v2828, %v2996
    %2998 = vmatmul.bf16.gmra.mxu0 %v1167
    %v2999 = vpop.f32.mrf.mxu0
    %v3000 = vadd.f32 %v2831, %v2999
    %v3001 = vpop.f32.mrf.mxu0
    %v3002 = vadd.f32 %v2833, %v3001
    %3003 = vmatmul.bf16.gmra.mxu0 %v1171
    %v3004 = vpop.f32.mrf.mxu0
    %v3005 = vadd.f32 %v2836, %v3004
    %v3006 = vpop.f32.mrf.mxu0
    %v3007 = vadd.f32 %v2838, %v3006
    %3008 = vmatmul.bf16.gmra.mxu0 %v1175
    %v3009 = vpop.f32.mrf.mxu0
    %v3010 = vadd.f32 %v2841, %v3009
    %v3011 = vpop.f32.mrf.mxu0
    %v3012 = vadd.f32 %v2843, %v3011
    %3013 = vmatmul.bf16.gmra.mxu0 %v1179
    %v3014 = vpop.f32.mrf.mxu0
    %v3015 = vadd.f32 %v2846, %v3014
    %v3016 = vpop.f32.mrf.mxu0
    %v3017 = vadd.f32 %v2848, %v3016
    %3018 = vmatmul.bf16.gmra.mxu0 %v1183
    %v3019 = vpop.f32.mrf.mxu0
    %v3020 = vadd.f32 %v2851, %v3019
    %v3021 = vpop.f32.mrf.mxu0
    %v3022 = vadd.f32 %v2853, %v3021
    %3023 = vmatmul.bf16.gmra.mxu0 %v1187
    %v3024 = vpop.f32.mrf.mxu0
    %v3025 = vadd.f32 %v2856, %v3024
    %v3026 = vpop.f32.mrf.mxu0
    %v3027 = vadd.f32 %v2858, %v3026
    %3028 = vmatmul.bf16.gmra.mxu0 %v1191
    %v3029 = vpop.f32.mrf.mxu0
    %v3030 = vadd.f32 %v2861, %v3029
    %v3031 = vpop.f32.mrf.mxu0
    %v3032 = vadd.f32 %v2863, %v3031
    %3033 = vmatmul.bf16.gmra.mxu0 %v1195
    %v3034 = vpop.f32.mrf.mxu0
    %v3035 = vadd.f32 %v2866, %v3034
    %v3036 = vpop.f32.mrf.mxu0
    %v3037 = vadd.f32 %v2868, %v3036
    %3038 = vmatmul.bf16.gmra.mxu0 %v1199
    %v3039 = vpop.f32.mrf.mxu0
    %v3040 = vadd.f32 %v2871, %v3039
    %v3041 = vpop.f32.mrf.mxu0
    %v3042 = vadd.f32 %v2873, %v3041
    %3043 = vmatmul.bf16.gmra.mxu0 %v1203
    %v3044 = vpop.f32.mrf.mxu0
    %v3045 = vadd.f32 %v2876, %v3044
    %v3046 = vpop.f32.mrf.mxu0
    %v3047 = vadd.f32 %v2878, %v3046
    %3048 = vdwg.mxu0
    %3049 = vst [vmem:[%s6] sm:$0xff] %v2890
    %3050 = vst [vmem:[%s6 + $0x8] sm:$0xff] %v2892
    %3051 = vst [vmem:[%s6 + $0x10] sm:$0xff] %v2895
    %3052 = vst [vmem:[%s6 + $0x18] sm:$0xff] %v2897
    %3053 = vst [vmem:[%s6 + $0x20] sm:$0xff] %v2900
    %3054 = vst [vmem:[%s6 + $0x28] sm:$0xff] %v2902
    %3055 = vst [vmem:[%s6 + $0x30] sm:$0xff] %v2905
    %3056 = vst [vmem:[%s6 + $0x38] sm:$0xff] %v2907
    %3057 = vst [vmem:[%s6 + $0x40] sm:$0xff] %v2910
    %3058 = vst [vmem:[%s6 + $0x48] sm:$0xff] %v2912
    %3059 = vst [vmem:[%s6 + $0x50] sm:$0xff] %v2915
    %3060 = vst [vmem:[%s6 + $0x58] sm:$0xff] %v2917
    %3061 = vst [vmem:[%s6 + $0x60] sm:$0xff] %v2920
    %3062 = vst [vmem:[%s6 + $0x68] sm:$0xff] %v2922
    %3063 = vst [vmem:[%s6 + $0x70] sm:$0xff] %v2925
    %3064 = vst [vmem:[%s6 + $0x78] sm:$0xff] %v2927
    %3065 = vst [vmem:[%s6 + $0x80] sm:$0xff] %v2930
    %3066 = vst [vmem:[%s6 + $0x88] sm:$0xff] %v2932
    %3067 = vst [vmem:[%s6 + $0x90] sm:$0xff] %v2935
    %3068 = vst [vmem:[%s6 + $0x98] sm:$0xff] %v2937
    %3069 = vst [vmem:[%s6 + $0xa0] sm:$0xff] %v2940
    %3070 = vst [vmem:[%s6 + $0xa8] sm:$0xff] %v2942
    %3071 = vst [vmem:[%s6 + $0xb0] sm:$0xff] %v2945
    %3072 = vst [vmem:[%s6 + $0xb8] sm:$0xff] %v2947
    %3073 = vst [vmem:[%s6 + $0xc0] sm:$0xff] %v2950
    %3074 = vst [vmem:[%s6 + $0xc8] sm:$0xff] %v2952
    %3075 = vst [vmem:[%s6 + $0xd0] sm:$0xff] %v2955
    %3076 = vst [vmem:[%s6 + $0xd8] sm:$0xff] %v2957
    %3077 = vst [vmem:[%s6 + $0xe0] sm:$0xff] %v2960
    %3078 = vst [vmem:[%s6 + $0xe8] sm:$0xff] %v2962
    %3079 = vst [vmem:[%s6 + $0xf0] sm:$0xff] %v2965
    %3080 = vst [vmem:[%s6 + $0xf8] sm:$0xff] %v2967
    %3081 = vst [vmem:[%s6 + $0x100] sm:$0xff] %v2970
    %3082 = vst [vmem:[%s6 + $0x108] sm:$0xff] %v2972
    %3083 = vst [vmem:[%s6 + $0x110] sm:$0xff] %v2975
    %3084 = vst [vmem:[%s6 + $0x118] sm:$0xff] %v2977
    %3085 = vst [vmem:[%s6 + $0x120] sm:$0xff] %v2980
    %3086 = vst [vmem:[%s6 + $0x128] sm:$0xff] %v2982
    %3087 = vst [vmem:[%s6 + $0x130] sm:$0xff] %v2985
    %3088 = vst [vmem:[%s6 + $0x138] sm:$0xff] %v2987
    %3089 = vst [vmem:[%s6 + $0x140] sm:$0xff] %v2990
    %3090 = vst [vmem:[%s6 + $0x148] sm:$0xff] %v2992
    %3091 = vst [vmem:[%s6 + $0x150] sm:$0xff] %v2995
    %3092 = vst [vmem:[%s6 + $0x158] sm:$0xff] %v2997
    %3093 = vst [vmem:[%s6 + $0x160] sm:$0xff] %v3000
    %3094 = vst [vmem:[%s6 + $0x168] sm:$0xff] %v3002
    %3095 = vst [vmem:[%s6 + $0x170] sm:$0xff] %v3005
    %3096 = vst [vmem:[%s6 + $0x178] sm:$0xff] %v3007
    %3097 = vst [vmem:[%s6 + $0x180] sm:$0xff] %v3010
    %3098 = vst [vmem:[%s6 + $0x188] sm:$0xff] %v3012
    %3099 = vst [vmem:[%s6 + $0x190] sm:$0xff] %v3015
    %3100 = vst [vmem:[%s6 + $0x198] sm:$0xff] %v3017
    %3101 = vst [vmem:[%s6 + $0x1a0] sm:$0xff] %v3020
    %3102 = vst [vmem:[%s6 + $0x1a8] sm:$0xff] %v3022
    %3103 = vst [vmem:[%s6 + $0x1b0] sm:$0xff] %v3025
    %3104 = vst [vmem:[%s6 + $0x1b8] sm:$0xff] %v3027
    %3105 = vst [vmem:[%s6 + $0x1c0] sm:$0xff] %v3030
    %3106 = vst [vmem:[%s6 + $0x1c8] sm:$0xff] %v3032
    %3107 = vst [vmem:[%s6 + $0x1d0] sm:$0xff] %v3035
    %3108 = vst [vmem:[%s6 + $0x1d8] sm:$0xff] %v3037
    %3109 = vst [vmem:[%s6 + $0x1e0] sm:$0xff] %v3040
    %3110 = vst [vmem:[%s6 + $0x1e8] sm:$0xff] %v3042
    %3111 = vst [vmem:[%s6 + $0x1f0] sm:$0xff] %v3045
    %3112 = vst [vmem:[%s6 + $0x1f8] sm:$0xff] %v3047
    // Predicated region
    $region30: #{gcn_body.1} parent=1 // pred_check
      _
    $region31: #{gcn_body.1} parent=1 // pred_check_branch
      %3114 = sbr.rel (0) target = $region33
    $region32: #{gcn_body.1} parent=1 // pred_region
      _
    $region33: #{gcn_body.1} parent=1 // pred_fallthru
      _
    // Predicated region
    $region34: #{gcn_body.1} parent=1 // pred_check
      _
    $region35: #{gcn_body.1} parent=1 // pred_check_branch
      %3116 = sbr.rel (0) target = $region37
    $region36: #{gcn_body.1} parent=1 // pred_region
      _
    $region37: #{gcn_body.1} parent=1 // pred_fallthru
      _
    %3117 = vsyncpa [#allocation3], 1

</llo_original>
